<compile_context>
chip_gen: v7x
topology: tpu7x:2x2x1
jax: 0.10.0
libtpu: 0.0.40
codegen_flags: <defaults>
</compile_context>

<pallas_src>
import functools

import jax
import jax.numpy as jnp
from jax.experimental import pallas as pl
from jax.experimental.pallas import tpu as pltpu

# ---- small synthetic SiglipVisionConfig ----
HIDDEN = 32            # hidden_size
INTERMEDIATE = 64      # intermediate_size
NUM_LAYERS = 2         # num_hidden_layers
NUM_HEADS = 2          # num_attention_heads
HEAD_DIM = HIDDEN // NUM_HEADS
NUM_CHANNELS = 3
IMAGE_SIZE = 16
PATCH_SIZE = 4
EPS = 1e-6
NUM_PATCHES = (IMAGE_SIZE // PATCH_SIZE) ** 2          # 16
PATCH_DIM = NUM_CHANNELS * PATCH_SIZE * PATCH_SIZE     # 48

LANE = 128             # TPU lane width
D_PAD = LANE           # hidden padded to one lane tile
I_PAD = LANE           # intermediate padded to one lane tile
PD_PAD = LANE          # patch dim padded to one lane tile
QKV_W = 3 * NUM_HEADS * LANE   # fused, head-blocked QKV projection width


# ---------------- helpers ----------------

def _pad_last(a, target):
    pad = target - a.shape[-1]
    if pad == 0:
        return a
    return jnp.pad(a, [(0, 0)] * (a.ndim - 1) + [(0, pad)])


def _pad_last2(a, tr, tc):
    pr, pc = tr - a.shape[-2], tc - a.shape[-1]
    if pr == 0 and pc == 0:
        return a
    return jnp.pad(a, [(0, 0)] * (a.ndim - 2) + [(0, pr), (0, pc)])


def _layernorm(x, w, b, d, eps):
    # Padded lanes of x are exactly zero, so full-width sums equal sums over
    # the real `d` lanes; normalize with the real divisor.  Padded lanes of
    # w/b are zero, so the output's padded lanes stay zero.
    inv_d = 1.0 / d
    mu = jnp.sum(x, axis=-1, keepdims=True) * inv_d
    var = jnp.sum(x * x, axis=-1, keepdims=True) * inv_d - mu * mu
    return (x - mu) * jax.lax.rsqrt(var + eps) * w + b


# ---------------- fused Pallas kernel ----------------

def fused_vit_kernel(patches_ref, pw_ref, posb_ref,
                     ln1w_ref, ln1b_ref, wqkv_ref, bqkv_ref, wo_ref, bo_ref,
                     ln2w_ref, ln2b_ref, w1_ref, b1_ref, w2_ref, b2_ref,
                     plnw_ref, plnb_ref, o_ref, x_ref,
                     *, hidden, num_heads, eps):
    li = pl.program_id(1)
    bf16 = jnp.bfloat16

    # ---- embeddings (patch conv as matmul + position embedding), first layer step only
    @pl.when(li == 0)
    def _():
        x_ref[...] = (jnp.dot(patches_ref[0], pw_ref[...],
                              preferred_element_type=jnp.float32)
                      + posb_ref[...])

    x = x_ref[...]                                  # [Np, 128] f32, lanes >= hidden are 0

    # ---- self-attention block ----
    h = _layernorm(x, ln1w_ref[0], ln1b_ref[0], hidden, eps)
    qkv = (jnp.dot(h.astype(bf16), wqkv_ref[0],
                   preferred_element_type=jnp.float32) + bqkv_ref[0])   # [Np, 3*H*128]
    # Every per-head slice below starts at a 128-lane boundary -> free views.
    # The attention scale is already folded into Wq/bq at pack time.
    ctx = jnp.zeros(x.shape, jnp.float32)
    for hh in range(num_heads):                     # static unroll over real heads
        q_h = qkv[:, hh * LANE:(hh + 1) * LANE].astype(bf16)
        k_h = qkv[:, (num_heads + hh) * LANE:(num_heads + hh + 1) * LANE].astype(bf16)
        v_h = qkv[:, (2 * num_heads + hh) * LANE:(2 * num_heads + hh + 1) * LANE].astype(bf16)
        s = jnp.einsum('qd,kd->qk', q_h, k_h,
                       preferred_element_type=jnp.float32)              # [Np, Np] f32
        s = s - jnp.max(s, axis=-1, keepdims=True)
        p = jnp.exp(s)
        p = p * pl.reciprocal(jnp.sum(p, axis=-1, keepdims=True), approx=False)
        # v_h carries this head's values at its destination lanes, so the
        # accumulate reconstructs the concatenated-head context directly.
        ctx = ctx + jnp.dot(p.astype(bf16), v_h,
                            preferred_element_type=jnp.float32)
    attn = (jnp.dot(ctx.astype(bf16), wo_ref[0],
                    preferred_element_type=jnp.float32) + bo_ref[0])
    x = x + attn                                    # residual

    # ---- MLP block ----
    h2 = _layernorm(x, ln2w_ref[0], ln2b_ref[0], hidden, eps)
    m = (jnp.dot(h2.astype(bf16), w1_ref[0],
                 preferred_element_type=jnp.float32) + b1_ref[0])
    m = jax.nn.gelu(m, approximate=True)            # gelu_pytorch_tanh
    m = (jnp.dot(m.astype(bf16), w2_ref[0],
                 preferred_element_type=jnp.float32) + b2_ref[0])
    x = x + m                                       # residual

    x_ref[...] = x                                  # carry to next layer step

    # ---- post layer-norm + lane-dense (128-wide) output store on the last layer
    @pl.when(li == pl.num_programs(1) - 1)
    def _():
        o_ref[0] = _layernorm(x, plnw_ref[...], plnb_ref[...], hidden, eps)


# ---------------- one-time parameter packing (hoisted out of the forward) ----------------

def pack_params(params):
    bf16 = jnp.bfloat16
    scale = HEAD_DIM ** -0.5
    layers = params["layers"]

    def head_block_w(w):
        # [D, D] -> [D_PAD, NUM_HEADS*128]; head h's columns live in lane block h
        # at relative lanes [h*HEAD_DIM, (h+1)*HEAD_DIM), zeros elsewhere.
        out = jnp.zeros((D_PAD, NUM_HEADS * LANE), jnp.float32)
        for h in range(NUM_HEADS):
            lo = h * LANE + h * HEAD_DIM
            out = out.at[:w.shape[0], lo:lo + HEAD_DIM].set(
                w[:, h * HEAD_DIM:(h + 1) * HEAD_DIM])
        return out

    def head_block_b(b):
        out = jnp.zeros((1, NUM_HEADS * LANE), jnp.float32)
        for h in range(NUM_HEADS):
            lo = h * LANE + h * HEAD_DIM
            out = out.at[:, lo:lo + HEAD_DIM].set(
                b[:, h * HEAD_DIM:(h + 1) * HEAD_DIM])
        return out

    def stack_vec(name, width=D_PAD):
        return jnp.stack([_pad_last(lp[name], width) for lp in layers])

    wqkv = jnp.stack([
        jnp.concatenate([head_block_w(lp["wq"] * scale),     # scale folded into Wq
                         head_block_w(lp["wk"]),
                         head_block_w(lp["wv"])], axis=-1)
        for lp in layers]).astype(bf16)                       # [L, 128, 3*H*128]
    bqkv = jnp.stack([
        jnp.concatenate([head_block_b(lp["bq"] * scale),
                         head_block_b(lp["bk"]),
                         head_block_b(lp["bv"])], axis=-1)
        for lp in layers])                                    # [L, 1, 3*H*128] f32

    return dict(
        patch_w=_pad_last2(params["patch_w"], PD_PAD, D_PAD).astype(bf16),
        posb=_pad_last(params["pos_emb"] + params["patch_b"], D_PAD),   # [Np, 128] f32
        ln1w=stack_vec("ln1_w"), ln1b=stack_vec("ln1_b"),
        wqkv=wqkv, bqkv=bqkv,
        wo=jnp.stack([_pad_last2(lp["wo"], D_PAD, D_PAD) for lp in layers]).astype(bf16),
        bo=stack_vec("bo"),
        ln2w=stack_vec("ln2_w"), ln2b=stack_vec("ln2_b"),
        w1=jnp.stack([_pad_last2(lp["w1"], D_PAD, I_PAD) for lp in layers]).astype(bf16),
        b1=stack_vec("b1", I_PAD),
        w2=jnp.stack([_pad_last2(lp["w2"], I_PAD, D_PAD) for lp in layers]).astype(bf16),
        b2=stack_vec("b2"),
        post_ln_w=_pad_last(params["post_ln_w"], D_PAD),
        post_ln_b=_pad_last(params["post_ln_b"], D_PAD),
    )


# ---------------- forward wrapper ----------------

def siglip_vision_transformer(pixel_values, packed):
    B, C, H, W = pixel_values.shape
    P = PATCH_SIZE
    Hp, Wp = H // P, W // P
    Np = Hp * Wp
    L = packed["wqkv"].shape[0]

    # im2col in (C, kh, kw) order == nn.Conv2d contraction order; pad the
    # patch dim to one lane tile and cast to bf16 for the MXU.
    patches = pixel_values.reshape(B, C, Hp, P, Wp, P)
    patches = patches.transpose(0, 2, 4, 1, 3, 5).reshape(B, Np, C * P * P)
    patches = _pad_last(patches, PD_PAD).astype(jnp.bfloat16)

    kernel = functools.partial(fused_vit_kernel, hidden=HIDDEN,
                               num_heads=NUM_HEADS, eps=EPS)

    def const2(shape):                       # resident, layer-independent
        return pl.BlockSpec(shape, lambda b, li: (0, 0))

    def per_layer(shape):                    # streamed per layer grid step
        return pl.BlockSpec(shape, lambda b, li: (li, 0, 0))

    in_specs = [
        pl.BlockSpec((1, Np, PD_PAD), lambda b, li: (b, 0, 0)),   # patches
        const2((PD_PAD, D_PAD)),                                   # patch_w
        const2((Np, D_PAD)),                                       # pos emb + conv bias
        per_layer((1, 1, D_PAD)),                                  # ln1_w
        per_layer((1, 1, D_PAD)),                                  # ln1_b
        per_layer((1, D_PAD, QKV_W)),                              # wqkv (head-blocked)
        per_layer((1, 1, QKV_W)),                                  # bqkv
        per_layer((1, D_PAD, D_PAD)),                              # wo
        per_layer((1, 1, D_PAD)),                                  # bo
        per_layer((1, 1, D_PAD)),                                  # ln2_w
        per_layer((1, 1, D_PAD)),                                  # ln2_b
        per_layer((1, D_PAD, I_PAD)),                              # w1
        per_layer((1, 1, I_PAD)),                                  # b1
        per_layer((1, I_PAD, D_PAD)),                              # w2
        per_layer((1, 1, D_PAD)),                                  # b2
        const2((1, D_PAD)),                                        # post_ln_w
        const2((1, D_PAD)),                                        # post_ln_b
    ]

    out = pl.pallas_call(
        kernel,
        out_shape=jax.ShapeDtypeStruct((B, Np, D_PAD), jnp.float32),
        grid=(B, L),
        in_specs=in_specs,
        out_specs=pl.BlockSpec((1, Np, D_PAD), lambda b, li: (b, 0, 0)),
        scratch_shapes=[pltpu.VMEM((Np, D_PAD), jnp.float32)],     # resident activations
        compiler_params=pltpu.CompilerParams(
            dimension_semantics=("parallel", "arbitrary")),
    )(patches, packed["patch_w"], packed["posb"],
      packed["ln1w"], packed["ln1b"], packed["wqkv"], packed["bqkv"],
      packed["wo"], packed["bo"], packed["ln2w"], packed["ln2b"],
      packed["w1"], packed["b1"], packed["w2"], packed["b2"],
      packed["post_ln_w"], packed["post_ln_b"])

    return out[:, :, :HIDDEN]                # drop the zero padding lanes


# ---------------- deterministic parameter init (x @ W layout) ----------------

def init_params(key):
    ks = jax.random.split(key, 2 + NUM_LAYERS)

    def nrm(k, shape, scale=0.02):
        return scale * jax.random.normal(k, shape, jnp.float32)

    params = {
        "patch_w": nrm(ks[0], (PATCH_DIM, HIDDEN)),      # Conv2d weight flattened (C,kh,kw)
        "patch_b": jnp.zeros((1, HIDDEN), jnp.float32),
        "pos_emb": nrm(ks[1], (NUM_PATCHES, HIDDEN)),
        "post_ln_w": jnp.ones((1, HIDDEN), jnp.float32),
        "post_ln_b": jnp.zeros((1, HIDDEN), jnp.float32),
        "layers": [],
    }
    for l in range(NUM_LAYERS):
        lk = jax.random.split(ks[2 + l], 6)
        params["layers"].append({
            "ln1_w": jnp.ones((1, HIDDEN), jnp.float32),
            "ln1_b": jnp.zeros((1, HIDDEN), jnp.float32),
            "wq": nrm(lk[0], (HIDDEN, HIDDEN)), "bq": jnp.zeros((1, HIDDEN), jnp.float32),
            "wk": nrm(lk[1], (HIDDEN, HIDDEN)), "bk": jnp.zeros((1, HIDDEN), jnp.float32),
            "wv": nrm(lk[2], (HIDDEN, HIDDEN)), "bv": jnp.zeros((1, HIDDEN), jnp.float32),
            "wo": nrm(lk[3], (HIDDEN, HIDDEN)), "bo": jnp.zeros((1, HIDDEN), jnp.float32),
            "ln2_w": jnp.ones((1, HIDDEN), jnp.float32),
            "ln2_b": jnp.zeros((1, HIDDEN), jnp.float32),
            "w1": nrm(lk[4], (HIDDEN, INTERMEDIATE)),
            "b1": jnp.zeros((1, INTERMEDIATE), jnp.float32),
            "w2": nrm(lk[5], (INTERMEDIATE, HIDDEN)),
            "b2": jnp.zeros((1, HIDDEN), jnp.float32),
        })
    return params


# ---------------- pure-JAX f32 reference (mirrors the PyTorch module) ----------------

def reference_forward(pixel_values, params):
    B, C, H, W = pixel_values.shape
    P = PATCH_SIZE
    Hp, Wp = H // P, W // P
    Np = Hp * Wp
    patches = pixel_values.reshape(B, C, Hp, P, Wp, P).transpose(0, 2, 4, 1, 3, 5)
    patches = patches.reshape(B, Np, C * P * P)
    x = patches @ params["patch_w"] + params["patch_b"] + params["pos_emb"]

    def ln(v, w, b):
        mu = v.mean(-1, keepdims=True)
        var = ((v - mu) ** 2).mean(-1, keepdims=True)
        return (v - mu) * jax.lax.rsqrt(var + EPS) * w + b

    scale = HEAD_DIM ** -0.5
    for lp in params["layers"]:
        h = ln(x, lp["ln1_w"], lp["ln1_b"])
        q = (h @ lp["wq"] + lp["bq"]) * scale
        k = h @ lp["wk"] + lp["bk"]
        v = h @ lp["wv"] + lp["bv"]
        q = q.reshape(B, Np, NUM_HEADS, HEAD_DIM).transpose(0, 2, 1, 3)
        k = k.reshape(B, Np, NUM_HEADS, HEAD_DIM).transpose(0, 2, 1, 3)
        v = v.reshape(B, Np, NUM_HEADS, HEAD_DIM).transpose(0, 2, 1, 3)
        s = jnp.einsum('bhqd,bhkd->bhqk', q, k)
        p = jax.nn.softmax(s, axis=-1)
        ctx = jnp.einsum('bhqk,bhkd->bhqd', p, v)
        ctx = ctx.transpose(0, 2, 1, 3).reshape(B, Np, HIDDEN)
        x = x + ctx @ lp["wo"] + lp["bo"]
        h2 = ln(x, lp["ln2_w"], lp["ln2_b"])
        m = jax.nn.gelu(h2 @ lp["w1"] + lp["b1"], approximate=True)
        x = x + m @ lp["w2"] + lp["b2"]
    return ln(x, params["post_ln_w"], params["post_ln_b"])


if __name__ == "__main__":
    key = jax.random.PRNGKey(0)
    pkey, xkey = jax.random.split(key)
    params = init_params(pkey)
    packed = pack_params(params)     # one-time packing, outside the jitted forward
    pixel_values = jax.random.normal(
        xkey, (2, NUM_CHANNELS, IMAGE_SIZE, IMAGE_SIZE), jnp.float32)

    forward = jax.jit(siglip_vision_transformer)
    out = forward(pixel_values, packed)
    jax.block_until_ready(out)

    assert out.shape == (2, NUM_PATCHES, HIDDEN)
    assert bool(jnp.all(jnp.isfinite(out)))
    ref = reference_forward(pixel_values, params)
    max_err = float(jnp.max(jnp.abs(out - ref)))
    # bf16 matmul operands (f32 accumulation) -> sub-1e-2 deviation expected.
    assert max_err < 0.1, f"max abs err vs f32 reference: {max_err}"
    print("KERNEL_OK")
</pallas_src>

<mosaic_0001>
module attributes {stable_mosaic.version = 11 : i64} {
  func.func @fused_vit_kernel(%arg0: i32, %arg1: i32, %arg2: memref<1x16x128xbf16, #tpu.memory_space<vmem>>, %arg3: memref<128x128xbf16, #tpu.memory_space<vmem>>, %arg4: memref<16x128xf32, #tpu.memory_space<vmem>>, %arg5: memref<1x1x128xf32, #tpu.memory_space<vmem>>, %arg6: memref<1x1x128xf32, #tpu.memory_space<vmem>>, %arg7: memref<1x128x768xbf16, #tpu.memory_space<vmem>>, %arg8: memref<1x1x768xf32, #tpu.memory_space<vmem>>, %arg9: memref<1x128x128xbf16, #tpu.memory_space<vmem>>, %arg10: memref<1x1x128xf32, #tpu.memory_space<vmem>>, %arg11: memref<1x1x128xf32, #tpu.memory_space<vmem>>, %arg12: memref<1x1x128xf32, #tpu.memory_space<vmem>>, %arg13: memref<1x128x128xbf16, #tpu.memory_space<vmem>>, %arg14: memref<1x1x128xf32, #tpu.memory_space<vmem>>, %arg15: memref<1x128x128xbf16, #tpu.memory_space<vmem>>, %arg16: memref<1x1x128xf32, #tpu.memory_space<vmem>>, %arg17: memref<1x128xf32, #tpu.memory_space<vmem>>, %arg18: memref<1x128xf32, #tpu.memory_space<vmem>>, %arg19: memref<1x16x128xf32, #tpu.memory_space<vmem>>, %arg20: memref<16x128xf32, #tpu.memory_space<vmem>>) attributes {dimension_semantics = [#tpu.dimension_semantics<parallel>, #tpu.dimension_semantics<arbitrary>], iteration_bounds = array<i64: 2, 2>, scalar_prefetch = 0 : i64, scratch_operands = 1 : i64, tpu.core_type = #tpu.core_type<tc>, window_params = [{transform_indices = @transform_0, window_bounds = array<i64: 1, 16, 128>}, {pipeline_mode = #tpu.pipeline_mode<synchronous>, transform_indices = @transform_1, window_bounds = array<i64: 128, 128>}, {pipeline_mode = #tpu.pipeline_mode<synchronous>, transform_indices = @transform_2, window_bounds = array<i64: 16, 128>}, {transform_indices = @transform_3, window_bounds = array<i64: 1, 1, 128>}, {transform_indices = @transform_4, window_bounds = array<i64: 1, 1, 128>}, {transform_indices = @transform_5, window_bounds = array<i64: 1, 128, 768>}, {transform_indices = @transform_6, window_bounds = array<i64: 1, 1, 768>}, {transform_indices = @transform_7, window_bounds = array<i64: 1, 128, 128>}, {transform_indices = @transform_8, window_bounds = array<i64: 1, 1, 128>}, {transform_indices = @transform_9, window_bounds = array<i64: 1, 1, 128>}, {transform_indices = @transform_10, window_bounds = array<i64: 1, 1, 128>}, {transform_indices = @transform_11, window_bounds = array<i64: 1, 128, 128>}, {transform_indices = @transform_12, window_bounds = array<i64: 1, 1, 128>}, {transform_indices = @transform_13, window_bounds = array<i64: 1, 128, 128>}, {transform_indices = @transform_14, window_bounds = array<i64: 1, 1, 128>}, {pipeline_mode = #tpu.pipeline_mode<synchronous>, transform_indices = @transform_15, window_bounds = array<i64: 1, 128>}, {pipeline_mode = #tpu.pipeline_mode<synchronous>, transform_indices = @transform_16, window_bounds = array<i64: 1, 128>}, {transform_indices = @transform_17, window_bounds = array<i64: 1, 16, 128>}]} {
    %c0_i32 = arith.constant 0 : i32
    %0 = arith.cmpi eq, %arg1, %c0_i32 : i32
    %1 = arith.extui %0 : i1 to i32
    %c0_i32_0 = arith.constant 0 : i32
    %2 = arith.cmpi ne, %1, %c0_i32_0 : i32
    scf.if %2 {
      %c0_67 = arith.constant 0 : index
      %c0_68 = arith.constant 0 : index
      %c0_69 = arith.constant 0 : index
      %148 = vector.load %arg2[%c0_67, %c0_68, %c0_69] : memref<1x16x128xbf16, #tpu.memory_space<vmem>>, vector<1x16x128xbf16>
      %149 = vector.shape_cast %148 : vector<1x16x128xbf16> to vector<16x128xbf16>
      %c0_70 = arith.constant 0 : index
      %c0_71 = arith.constant 0 : index
      %150 = vector.load %arg3[%c0_70, %c0_71] : memref<128x128xbf16, #tpu.memory_space<vmem>>, vector<128x128xbf16>
      %cst_72 = arith.constant dense<0.000000e+00> : vector<16x128xf32>
      %151 = tpu.matmul %149, %150, %cst_72 {dimension_numbers = #tpu.dot_dimension_numbers<[1], [0], [0], [1], [0, 0, 1, 1], [], []>} : vector<16x128xbf16>, vector<128x128xbf16>, vector<16x128xf32> -> vector<16x128xf32>
      %c0_73 = arith.constant 0 : index
      %c0_74 = arith.constant 0 : index
      %152 = vector.load %arg4[%c0_73, %c0_74] : memref<16x128xf32, #tpu.memory_space<vmem>>, vector<16x128xf32>
      %153 = arith.addf %151, %152 : vector<16x128xf32>
      %c0_75 = arith.constant 0 : index
      %c0_76 = arith.constant 0 : index
      %154 = vector.load %arg20[%c0_75, %c0_76] : memref<16x128xf32, #tpu.memory_space<vmem>>, vector<16x128xf32>
      tpu.vector_store %arg20[%c0_75, %c0_76], %153 {strides = array<i32>} : memref<16x128xf32, #tpu.memory_space<vmem>>, vector<16x128xf32>,
    } else {
    }
    %c0 = arith.constant 0 : index
    %c0_1 = arith.constant 0 : index
    %3 = vector.load %arg20[%c0, %c0_1] : memref<16x128xf32, #tpu.memory_space<vmem>>, vector<16x128xf32>
    %c0_2 = arith.constant 0 : index
    %c0_3 = arith.constant 0 : index
    %c0_4 = arith.constant 0 : index
    %4 = vector.load %arg5[%c0_2, %c0_3, %c0_4] : memref<1x1x128xf32, #tpu.memory_space<vmem>>, vector<1x1x128xf32>
    %5 = vector.shape_cast %4 : vector<1x1x128xf32> to vector<1x128xf32>
    %c0_5 = arith.constant 0 : index
    %c0_6 = arith.constant 0 : index
    %c0_7 = arith.constant 0 : index
    %6 = vector.load %arg6[%c0_5, %c0_6, %c0_7] : memref<1x1x128xf32, #tpu.memory_space<vmem>>, vector<1x1x128xf32>
    %7 = vector.shape_cast %6 : vector<1x1x128xf32> to vector<1x128xf32>
    %cst = arith.constant dense<0.000000e+00> : vector<16xf32>
    %8 = vector.multi_reduction <add>, %3, %cst [1] : vector<16x128xf32> to vector<16xf32>
    %9 = vector.shape_cast %8 : vector<16xf32> to vector<16x1xf32>
    %cst_8 = arith.constant 3.125000e-02 : f32
    %10 = vector.broadcast %cst_8 : f32 to vector<16x1xf32>
    %11 = arith.mulf %9, %10 : vector<16x1xf32>
    %12 = arith.mulf %3, %3 : vector<16x128xf32>
    %cst_9 = arith.constant dense<0.000000e+00> : vector<16xf32>
    %13 = vector.multi_reduction <add>, %12, %cst_9 [1] : vector<16x128xf32> to vector<16xf32>
    %14 = vector.shape_cast %13 : vector<16xf32> to vector<16x1xf32>
    %cst_10 = arith.constant 3.125000e-02 : f32
    %15 = vector.broadcast %cst_10 : f32 to vector<16x1xf32>
    %16 = arith.mulf %14, %15 : vector<16x1xf32>
    %17 = arith.mulf %11, %11 : vector<16x1xf32>
    %18 = arith.subf %16, %17 : vector<16x1xf32>
    %19 = vector.broadcast %11 : vector<16x1xf32> to vector<16x128xf32>
    %20 = arith.subf %3, %19 : vector<16x128xf32>
    %cst_11 = arith.constant 9.99999997E-7 : f32
    %21 = vector.broadcast %cst_11 : f32 to vector<16x1xf32>
    %22 = arith.addf %18, %21 : vector<16x1xf32>
    %23 = math.rsqrt %22 : vector<16x1xf32>
    %24 = vector.broadcast %23 : vector<16x1xf32> to vector<16x128xf32>
    %25 = arith.mulf %20, %24 : vector<16x128xf32>
    %26 = vector.broadcast %5 : vector<1x128xf32> to vector<16x128xf32>
    %27 = arith.mulf %25, %26 : vector<16x128xf32>
    %28 = vector.broadcast %7 : vector<1x128xf32> to vector<16x128xf32>
    %29 = arith.addf %27, %28 : vector<16x128xf32>
    %30 = arith.truncf %29 : vector<16x128xf32> to vector<16x128xbf16>
    %c0_12 = arith.constant 0 : index
    %c0_13 = arith.constant 0 : index
    %c0_14 = arith.constant 0 : index
    %31 = vector.load %arg7[%c0_12, %c0_13, %c0_14] : memref<1x128x768xbf16, #tpu.memory_space<vmem>>, vector<1x128x768xbf16>
    %32 = vector.shape_cast %31 : vector<1x128x768xbf16> to vector<128x768xbf16>
    %cst_15 = arith.constant dense<0.000000e+00> : vector<16x768xf32>
    %33 = tpu.matmul %30, %32, %cst_15 {dimension_numbers = #tpu.dot_dimension_numbers<[1], [0], [0], [1], [0, 0, 1, 1], [], []>} : vector<16x128xbf16>, vector<128x768xbf16>, vector<16x768xf32> -> vector<16x768xf32>
    %c0_16 = arith.constant 0 : index
    %c0_17 = arith.constant 0 : index
    %c0_18 = arith.constant 0 : index
    %34 = vector.load %arg8[%c0_16, %c0_17, %c0_18] : memref<1x1x768xf32, #tpu.memory_space<vmem>>, vector<1x1x768xf32>
    %35 = vector.shape_cast %34 : vector<1x1x768xf32> to vector<1x768xf32>
    %36 = vector.broadcast %35 : vector<1x768xf32> to vector<16x768xf32>
    %37 = arith.addf %33, %36 : vector<16x768xf32>
    %cst_19 = arith.constant 0.000000e+00 : f32
    %38 = vector.broadcast %cst_19 : f32 to vector<16x128xf32>
    %39 = vector.extract_strided_slice %37 {offsets = [0, 0], sizes = [16, 128], strides = [1, 1]} : vector<16x768xf32> to vector<16x128xf32>
    %40 = arith.truncf %39 : vector<16x128xf32> to vector<16x128xbf16>
    %41 = vector.extract_strided_slice %37 {offsets = [0, 256], sizes = [16, 128], strides = [1, 1]} : vector<16x768xf32> to vector<16x128xf32>
    %42 = arith.truncf %41 : vector<16x128xf32> to vector<16x128xbf16>
    %43 = vector.extract_strided_slice %37 {offsets = [0, 512], sizes = [16, 128], strides = [1, 1]} : vector<16x768xf32> to vector<16x128xf32>
    %44 = arith.truncf %43 : vector<16x128xf32> to vector<16x128xbf16>
    "tpu.trace_start"() <{level = 10 : i32, message = "qd,kd->qk"}> : () -> ()
    %cst_20 = arith.constant dense<0.000000e+00> : vector<16x16xf32>
    %45 = tpu.matmul %40, %42, %cst_20 {dimension_numbers = #tpu.dot_dimension_numbers<[1], [1], [0], [0], [0, 0, 1, 0], [], []>} : vector<16x128xbf16>, vector<16x128xbf16>, vector<16x16xf32> -> vector<16x16xf32>
    "tpu.trace_stop"() : () -> ()
    %cst_21 = arith.constant dense<0xFF800000> : vector<16xf32>
    %46 = vector.multi_reduction <maximumf>, %45, %cst_21 [1] : vector<16x16xf32> to vector<16xf32>
    %47 = vector.shape_cast %46 : vector<16xf32> to vector<16x1xf32>
    %48 = vector.broadcast %47 : vector<16x1xf32> to vector<16x16xf32>
    %49 = arith.subf %45, %48 : vector<16x16xf32>
    %50 = math.exp %49 : vector<16x16xf32>
    %cst_22 = arith.constant dense<0.000000e+00> : vector<16xf32>
    %51 = vector.multi_reduction <add>, %50, %cst_22 [1] : vector<16x16xf32> to vector<16xf32>
    %52 = vector.shape_cast %51 : vector<16xf32> to vector<16x1xf32>
    %53 = tpu.reciprocal %52 : vector<16x1xf32> -> vector<16x1xf32>
    %54 = vector.broadcast %53 : vector<16x1xf32> to vector<16x16xf32>
    %55 = arith.mulf %50, %54 : vector<16x16xf32>
    %56 = arith.truncf %55 : vector<16x16xf32> to vector<16x16xbf16>
    %cst_23 = arith.constant dense<0.000000e+00> : vector<16x128xf32>
    %57 = tpu.matmul %56, %44, %cst_23 {dimension_numbers = #tpu.dot_dimension_numbers<[1], [0], [0], [1], [0, 0, 1, 1], [], []>} : vector<16x16xbf16>, vector<16x128xbf16>, vector<16x128xf32> -> vector<16x128xf32>
    %58 = arith.addf %38, %57 : vector<16x128xf32>
    %59 = vector.extract_strided_slice %37 {offsets = [0, 128], sizes = [16, 128], strides = [1, 1]} : vector<16x768xf32> to vector<16x128xf32>
    %60 = arith.truncf %59 : vector<16x128xf32> to vector<16x128xbf16>
    %61 = vector.extract_strided_slice %37 {offsets = [0, 384], sizes = [16, 128], strides = [1, 1]} : vector<16x768xf32> to vector<16x128xf32>
    %62 = arith.truncf %61 : vector<16x128xf32> to vector<16x128xbf16>
    %63 = vector.extract_strided_slice %37 {offsets = [0, 640], sizes = [16, 128], strides = [1, 1]} : vector<16x768xf32> to vector<16x128xf32>
    %64 = arith.truncf %63 : vector<16x128xf32> to vector<16x128xbf16>
    "tpu.trace_start"() <{level = 10 : i32, message = "qd,kd->qk"}> : () -> ()
    %cst_24 = arith.constant dense<0.000000e+00> : vector<16x16xf32>
    %65 = tpu.matmul %60, %62, %cst_24 {dimension_numbers = #tpu.dot_dimension_numbers<[1], [1], [0], [0], [0, 0, 1, 0], [], []>} : vector<16x128xbf16>, vector<16x128xbf16>, vector<16x16xf32> -> vector<16x16xf32>
    "tpu.trace_stop"() : () -> ()
    %cst_25 = arith.constant dense<0xFF800000> : vector<16xf32>
    %66 = vector.multi_reduction <maximumf>, %65, %cst_25 [1] : vector<16x16xf32> to vector<16xf32>
    %67 = vector.shape_cast %66 : vector<16xf32> to vector<16x1xf32>
    %68 = vector.broadcast %67 : vector<16x1xf32> to vector<16x16xf32>
    %69 = arith.subf %65, %68 : vector<16x16xf32>
    %70 = math.exp %69 : vector<16x16xf32>
    %cst_26 = arith.constant dense<0.000000e+00> : vector<16xf32>
    %71 = vector.multi_reduction <add>, %70, %cst_26 [1] : vector<16x16xf32> to vector<16xf32>
    %72 = vector.shape_cast %71 : vector<16xf32> to vector<16x1xf32>
    %73 = tpu.reciprocal %72 : vector<16x1xf32> -> vector<16x1xf32>
    %74 = vector.broadcast %73 : vector<16x1xf32> to vector<16x16xf32>
    %75 = arith.mulf %70, %74 : vector<16x16xf32>
    %76 = arith.truncf %75 : vector<16x16xf32> to vector<16x16xbf16>
    %cst_27 = arith.constant dense<0.000000e+00> : vector<16x128xf32>
    %77 = tpu.matmul %76, %64, %cst_27 {dimension_numbers = #tpu.dot_dimension_numbers<[1], [0], [0], [1], [0, 0, 1, 1], [], []>} : vector<16x16xbf16>, vector<16x128xbf16>, vector<16x128xf32> -> vector<16x128xf32>
    %78 = arith.addf %58, %77 : vector<16x128xf32>
    %79 = arith.truncf %78 : vector<16x128xf32> to vector<16x128xbf16>
    %c0_28 = arith.constant 0 : index
    %c0_29 = arith.constant 0 : index
    %c0_30 = arith.constant 0 : index
    %80 = vector.load %arg9[%c0_28, %c0_29, %c0_30] : memref<1x128x128xbf16, #tpu.memory_space<vmem>>, vector<1x128x128xbf16>
    %81 = vector.shape_cast %80 : vector<1x128x128xbf16> to vector<128x128xbf16>
    %cst_31 = arith.constant dense<0.000000e+00> : vector<16x128xf32>
    %82 = tpu.matmul %79, %81, %cst_31 {dimension_numbers = #tpu.dot_dimension_numbers<[1], [0], [0], [1], [0, 0, 1, 1], [], []>} : vector<16x128xbf16>, vector<128x128xbf16>, vector<16x128xf32> -> vector<16x128xf32>
    %c0_32 = arith.constant 0 : index
    %c0_33 = arith.constant 0 : index
    %c0_34 = arith.constant 0 : index
    %83 = vector.load %arg10[%c0_32, %c0_33, %c0_34] : memref<1x1x128xf32, #tpu.memory_space<vmem>>, vector<1x1x128xf32>
    %84 = vector.shape_cast %83 : vector<1x1x128xf32> to vector<1x128xf32>
    %85 = vector.broadcast %84 : vector<1x128xf32> to vector<16x128xf32>
    %86 = arith.addf %82, %85 : vector<16x128xf32>
    %87 = arith.addf %3, %86 : vector<16x128xf32>
    %c0_35 = arith.constant 0 : index
    %c0_36 = arith.constant 0 : index
    %c0_37 = arith.constant 0 : index
    %88 = vector.load %arg11[%c0_35, %c0_36, %c0_37] : memref<1x1x128xf32, #tpu.memory_space<vmem>>, vector<1x1x128xf32>
    %89 = vector.shape_cast %88 : vector<1x1x128xf32> to vector<1x128xf32>
    %c0_38 = arith.constant 0 : index
    %c0_39 = arith.constant 0 : index
    %c0_40 = arith.constant 0 : index
    %90 = vector.load %arg12[%c0_38, %c0_39, %c0_40] : memref<1x1x128xf32, #tpu.memory_space<vmem>>, vector<1x1x128xf32>
    %91 = vector.shape_cast %90 : vector<1x1x128xf32> to vector<1x128xf32>
    %cst_41 = arith.constant dense<0.000000e+00> : vector<16xf32>
    %92 = vector.multi_reduction <add>, %87, %cst_41 [1] : vector<16x128xf32> to vector<16xf32>
    %93 = vector.shape_cast %92 : vector<16xf32> to vector<16x1xf32>
    %cst_42 = arith.constant 3.125000e-02 : f32
    %94 = vector.broadcast %cst_42 : f32 to vector<16x1xf32>
    %95 = arith.mulf %93, %94 : vector<16x1xf32>
    %96 = arith.mulf %87, %87 : vector<16x128xf32>
    %cst_43 = arith.constant dense<0.000000e+00> : vector<16xf32>
    %97 = vector.multi_reduction <add>, %96, %cst_43 [1] : vector<16x128xf32> to vector<16xf32>
    %98 = vector.shape_cast %97 : vector<16xf32> to vector<16x1xf32>
    %cst_44 = arith.constant 3.125000e-02 : f32
    %99 = vector.broadcast %cst_44 : f32 to vector<16x1xf32>
    %100 = arith.mulf %98, %99 : vector<16x1xf32>
    %101 = arith.mulf %95, %95 : vector<16x1xf32>
    %102 = arith.subf %100, %101 : vector<16x1xf32>
    %103 = vector.broadcast %95 : vector<16x1xf32> to vector<16x128xf32>
    %104 = arith.subf %87, %103 : vector<16x128xf32>
    %cst_45 = arith.constant 9.99999997E-7 : f32
    %105 = vector.broadcast %cst_45 : f32 to vector<16x1xf32>
    %106 = arith.addf %102, %105 : vector<16x1xf32>
    %107 = math.rsqrt %106 : vector<16x1xf32>
    %108 = vector.broadcast %107 : vector<16x1xf32> to vector<16x128xf32>
    %109 = arith.mulf %104, %108 : vector<16x128xf32>
    %110 = vector.broadcast %89 : vector<1x128xf32> to vector<16x128xf32>
    %111 = arith.mulf %109, %110 : vector<16x128xf32>
    %112 = vector.broadcast %91 : vector<1x128xf32> to vector<16x128xf32>
    %113 = arith.addf %111, %112 : vector<16x128xf32>
    %114 = arith.truncf %113 : vector<16x128xf32> to vector<16x128xbf16>
    %c0_46 = arith.constant 0 : index
    %c0_47 = arith.constant 0 : index
    %c0_48 = arith.constant 0 : index
    %115 = vector.load %arg13[%c0_46, %c0_47, %c0_48] : memref<1x128x128xbf16, #tpu.memory_space<vmem>>, vector<1x128x128xbf16>
    %116 = vector.shape_cast %115 : vector<1x128x128xbf16> to vector<128x128xbf16>
    %cst_49 = arith.constant dense<0.000000e+00> : vector<16x128xf32>
    %117 = tpu.matmul %114, %116, %cst_49 {dimension_numbers = #tpu.dot_dimension_numbers<[1], [0], [0], [1], [0, 0, 1, 1], [], []>} : vector<16x128xbf16>, vector<128x128xbf16>, vector<16x128xf32> -> vector<16x128xf32>
    %c0_50 = arith.constant 0 : index
    %c0_51 = arith.constant 0 : index
    %c0_52 = arith.constant 0 : index
    %118 = vector.load %arg14[%c0_50, %c0_51, %c0_52] : memref<1x1x128xf32, #tpu.memory_space<vmem>>, vector<1x1x128xf32>
    %119 = vector.shape_cast %118 : vector<1x1x128xf32> to vector<1x128xf32>
    %120 = vector.broadcast %119 : vector<1x128xf32> to vector<16x128xf32>
    %121 = arith.addf %117, %120 : vector<16x128xf32>
    %122 = arith.mulf %121, %121 : vector<16x128xf32>
    %123 = arith.mulf %121, %122 : vector<16x128xf32>
    %cst_53 = arith.constant 4.471500e-02 : f32
    %124 = vector.broadcast %cst_53 : f32 to vector<16x128xf32>
    %125 = arith.mulf %124, %123 : vector<16x128xf32>
    %126 = arith.addf %121, %125 : vector<16x128xf32>
    %cst_54 = arith.constant 0.797884583 : f32
    %127 = vector.broadcast %cst_54 : f32 to vector<16x128xf32>
    %128 = arith.mulf %127, %126 : vector<16x128xf32>
    %129 = math.tanh %128 : vector<16x128xf32>
    %cst_55 = arith.constant 1.000000e+00 : f32
    %130 = vector.broadcast %cst_55 : f32 to vector<16x128xf32>
    %131 = arith.addf %130, %129 : vector<16x128xf32>
    %cst_56 = arith.constant 5.000000e-01 : f32
    %132 = vector.broadcast %cst_56 : f32 to vector<16x128xf32>
    %133 = arith.mulf %132, %131 : vector<16x128xf32>
    %134 = arith.mulf %121, %133 : vector<16x128xf32>
    %135 = arith.truncf %134 : vector<16x128xf32> to vector<16x128xbf16>
    %c0_57 = arith.constant 0 : index
    %c0_58 = arith.constant 0 : index
    %c0_59 = arith.constant 0 : index
    %136 = vector.load %arg15[%c0_57, %c0_58, %c0_59] : memref<1x128x128xbf16, #tpu.memory_space<vmem>>, vector<1x128x128xbf16>
    %137 = vector.shape_cast %136 : vector<1x128x128xbf16> to vector<128x128xbf16>
    %cst_60 = arith.constant dense<0.000000e+00> : vector<16x128xf32>
    %138 = tpu.matmul %135, %137, %cst_60 {dimension_numbers = #tpu.dot_dimension_numbers<[1], [0], [0], [1], [0, 0, 1, 1], [], []>} : vector<16x128xbf16>, vector<128x128xbf16>, vector<16x128xf32> -> vector<16x128xf32>
    %c0_61 = arith.constant 0 : index
    %c0_62 = arith.constant 0 : index
    %c0_63 = arith.constant 0 : index
    %139 = vector.load %arg16[%c0_61, %c0_62, %c0_63] : memref<1x1x128xf32, #tpu.memory_space<vmem>>, vector<1x1x128xf32>
    %140 = vector.shape_cast %139 : vector<1x1x128xf32> to vector<1x128xf32>
    %141 = vector.broadcast %140 : vector<1x128xf32> to vector<16x128xf32>
    %142 = arith.addf %138, %141 : vector<16x128xf32>
    %143 = arith.addf %87, %142 : vector<16x128xf32>
    %c0_64 = arith.constant 0 : index
    %c0_65 = arith.constant 0 : index
    %144 = vector.load %arg20[%c0_64, %c0_65] : memref<16x128xf32, #tpu.memory_space<vmem>>, vector<16x128xf32>
    tpu.vector_store %arg20[%c0_64, %c0_65], %143 {strides = array<i32>} : memref<16x128xf32, #tpu.memory_space<vmem>>, vector<16x128xf32>,
    %c1_i32 = arith.constant 1 : i32
    %145 = arith.cmpi eq, %arg1, %c1_i32 : i32
    %146 = arith.extui %145 : i1 to i32
    %c0_i32_66 = arith.constant 0 : i32
    %147 = arith.cmpi ne, %146, %c0_i32_66 : i32
    scf.if %147 {
      %c0_67 = arith.constant 0 : index
      %c0_68 = arith.constant 0 : index
      %148 = vector.load %arg17[%c0_67, %c0_68] : memref<1x128xf32, #tpu.memory_space<vmem>>, vector<1x128xf32>
      %c0_69 = arith.constant 0 : index
      %c0_70 = arith.constant 0 : index
      %149 = vector.load %arg18[%c0_69, %c0_70] : memref<1x128xf32, #tpu.memory_space<vmem>>, vector<1x128xf32>
      %cst_71 = arith.constant dense<0.000000e+00> : vector<16xf32>
      %150 = vector.multi_reduction <add>, %143, %cst_71 [1] : vector<16x128xf32> to vector<16xf32>
      %151 = vector.shape_cast %150 : vector<16xf32> to vector<16x1xf32>
      %cst_72 = arith.constant 3.125000e-02 : f32
      %152 = vector.broadcast %cst_72 : f32 to vector<16x1xf32>
      %153 = arith.mulf %151, %152 : vector<16x1xf32>
      %154 = arith.mulf %143, %143 : vector<16x128xf32>
      %cst_73 = arith.constant dense<0.000000e+00> : vector<16xf32>
      %155 = vector.multi_reduction <add>, %154, %cst_73 [1] : vector<16x128xf32> to vector<16xf32>
      %156 = vector.shape_cast %155 : vector<16xf32> to vector<16x1xf32>
      %cst_74 = arith.constant 3.125000e-02 : f32
      %157 = vector.broadcast %cst_74 : f32 to vector<16x1xf32>
      %158 = arith.mulf %156, %157 : vector<16x1xf32>
      %159 = arith.mulf %153, %153 : vector<16x1xf32>
      %160 = arith.subf %158, %159 : vector<16x1xf32>
      %161 = vector.broadcast %153 : vector<16x1xf32> to vector<16x128xf32>
      %162 = arith.subf %143, %161 : vector<16x128xf32>
      %cst_75 = arith.constant 9.99999997E-7 : f32
      %163 = vector.broadcast %cst_75 : f32 to vector<16x1xf32>
      %164 = arith.addf %160, %163 : vector<16x1xf32>
      %165 = math.rsqrt %164 : vector<16x1xf32>
      %166 = vector.broadcast %165 : vector<16x1xf32> to vector<16x128xf32>
      %167 = arith.mulf %162, %166 : vector<16x128xf32>
      %168 = vector.broadcast %148 : vector<1x128xf32> to vector<16x128xf32>
      %169 = arith.mulf %167, %168 : vector<16x128xf32>
      %170 = vector.broadcast %149 : vector<1x128xf32> to vector<16x128xf32>
      %171 = arith.addf %169, %170 : vector<16x128xf32>
      %c0_76 = arith.constant 0 : index
      %c0_77 = arith.constant 0 : index
      %c0_78 = arith.constant 0 : index
      %172 = vector.load %arg19[%c0_76, %c0_77, %c0_78] : memref<1x16x128xf32, #tpu.memory_space<vmem>>, vector<1x16x128xf32>
      %173 = vector.shape_cast %172 : vector<1x16x128xf32> to vector<16x128xf32>
      %174 = vector.shape_cast %171 : vector<16x128xf32> to vector<1x16x128xf32>
      tpu.vector_store %arg19[%c0_76, %c0_77, %c0_78], %174 {strides = array<i32>} : memref<1x16x128xf32, #tpu.memory_space<vmem>>, vector<1x16x128xf32>,
    } else {
    }
    return
  }
  func.func @transform_0(%arg0: i32, %arg1: i32) -> (i32, i32, i32) {
    %c0_i32 = arith.constant 0 : i32
    %c0_i32_0 = arith.constant 0 : i32
    %c0_i32_1 = arith.constant 0 : i32
    return %arg0, %c0_i32, %c0_i32_0 : i32, i32, i32
  }
  func.func @transform_1(%arg0: i32, %arg1: i32) -> (i32, i32) {
    %c0_i32 = arith.constant 0 : i32
    %c0_i32_0 = arith.constant 0 : i32
    %c0_i32_1 = arith.constant 0 : i32
    return %c0_i32, %c0_i32_0 : i32, i32
  }
  func.func @transform_2(%arg0: i32, %arg1: i32) -> (i32, i32) {
    %c0_i32 = arith.constant 0 : i32
    %c0_i32_0 = arith.constant 0 : i32
    %c0_i32_1 = arith.constant 0 : i32
    return %c0_i32, %c0_i32_0 : i32, i32
  }
  func.func @transform_3(%arg0: i32, %arg1: i32) -> (i32, i32, i32) {
    %c0_i32 = arith.constant 0 : i32
    %c0_i32_0 = arith.constant 0 : i32
    %c0_i32_1 = arith.constant 0 : i32
    return %arg1, %c0_i32, %c0_i32_0 : i32, i32, i32
  }
  func.func @transform_4(%arg0: i32, %arg1: i32) -> (i32, i32, i32) {
    %c0_i32 = arith.constant 0 : i32
    %c0_i32_0 = arith.constant 0 : i32
    %c0_i32_1 = arith.constant 0 : i32
    return %arg1, %c0_i32, %c0_i32_0 : i32, i32, i32
  }
  func.func @transform_5(%arg0: i32, %arg1: i32) -> (i32, i32, i32) {
    %c0_i32 = arith.constant 0 : i32
    %c0_i32_0 = arith.constant 0 : i32
    %c0_i32_1 = arith.constant 0 : i32
    return %arg1, %c0_i32, %c0_i32_0 : i32, i32, i32
  }
  func.func @transform_6(%arg0: i32, %arg1: i32) -> (i32, i32, i32) {
    %c0_i32 = arith.constant 0 : i32
    %c0_i32_0 = arith.constant 0 : i32
    %c0_i32_1 = arith.constant 0 : i32
    return %arg1, %c0_i32, %c0_i32_0 : i32, i32, i32
  }
  func.func @transform_7(%arg0: i32, %arg1: i32) -> (i32, i32, i32) {
    %c0_i32 = arith.constant 0 : i32
    %c0_i32_0 = arith.constant 0 : i32
    %c0_i32_1 = arith.constant 0 : i32
    return %arg1, %c0_i32, %c0_i32_0 : i32, i32, i32
  }
  func.func @transform_8(%arg0: i32, %arg1: i32) -> (i32, i32, i32) {
    %c0_i32 = arith.constant 0 : i32
    %c0_i32_0 = arith.constant 0 : i32
    %c0_i32_1 = arith.constant 0 : i32
    return %arg1, %c0_i32, %c0_i32_0 : i32, i32, i32
  }
  func.func @transform_9(%arg0: i32, %arg1: i32) -> (i32, i32, i32) {
    %c0_i32 = arith.constant 0 : i32
    %c0_i32_0 = arith.constant 0 : i32
    %c0_i32_1 = arith.constant 0 : i32
    return %arg1, %c0_i32, %c0_i32_0 : i32, i32, i32
  }
  func.func @transform_10(%arg0: i32, %arg1: i32) -> (i32, i32, i32) {
    %c0_i32 = arith.constant 0 : i32
    %c0_i32_0 = arith.constant 0 : i32
    %c0_i32_1 = arith.constant 0 : i32
    return %arg1, %c0_i32, %c0_i32_0 : i32, i32, i32
  }
  func.func @transform_11(%arg0: i32, %arg1: i32) -> (i32, i32, i32) {
    %c0_i32 = arith.constant 0 : i32
    %c0_i32_0 = arith.constant 0 : i32
    %c0_i32_1 = arith.constant 0 : i32
    return %arg1, %c0_i32, %c0_i32_0 : i32, i32, i32
  }
  func.func @transform_12(%arg0: i32, %arg1: i32) -> (i32, i32, i32) {
    %c0_i32 = arith.constant 0 : i32
    %c0_i32_0 = arith.constant 0 : i32
    %c0_i32_1 = arith.constant 0 : i32
    return %arg1, %c0_i32, %c0_i32_0 : i32, i32, i32
  }
  func.func @transform_13(%arg0: i32, %arg1: i32) -> (i32, i32, i32) {
    %c0_i32 = arith.constant 0 : i32
    %c0_i32_0 = arith.constant 0 : i32
    %c0_i32_1 = arith.constant 0 : i32
    return %arg1, %c0_i32, %c0_i32_0 : i32, i32, i32
  }
  func.func @transform_14(%arg0: i32, %arg1: i32) -> (i32, i32, i32) {
    %c0_i32 = arith.constant 0 : i32
    %c0_i32_0 = arith.constant 0 : i32
    %c0_i32_1 = arith.constant 0 : i32
    return %arg1, %c0_i32, %c0_i32_0 : i32, i32, i32
  }
  func.func @transform_15(%arg0: i32, %arg1: i32) -> (i32, i32) {
    %c0_i32 = arith.constant 0 : i32
    %c0_i32_0 = arith.constant 0 : i32
    %c0_i32_1 = arith.constant 0 : i32
    return %c0_i32, %c0_i32_0 : i32, i32
  }
  func.func @transform_16(%arg0: i32, %arg1: i32) -> (i32, i32) {
    %c0_i32 = arith.constant 0 : i32
    %c0_i32_0 = arith.constant 0 : i32
    %c0_i32_1 = arith.constant 0 : i32
    return %c0_i32, %c0_i32_0 : i32, i32
  }
  func.func @transform_17(%arg0: i32, %arg1: i32) -> (i32, i32, i32) {
    %c0_i32 = arith.constant 0 : i32
    %c0_i32_0 = arith.constant 0 : i32
    %c0_i32_1 = arith.constant 0 : i32
    return %arg0, %c0_i32, %c0_i32_0 : i32, i32, i32
  }
}

</mosaic_0001>

<llo_original>
// kernel: siglip_vision_transformer.1
$region0: #{siglip_vision_transformer.1}
  #allocation0 [shape = 'u32[]', space=smem, size = 0x4, offset = 0x4, fixed_abs, tag = 'smem constant byte address 0x4 - core index']
  #allocation1 [shape = 'u32[144,128]{1,0:T(1,128)}', space=vmem, size = 0x12000, scoped, tag = 'internal scratch']
  #allocation2 [shape = 'f32[16,128]{1,0:T(8,128)}', space=vmem, size = 0x2000, scoped, tag = 'scratch operand']
  %s0 = inlined_call_operand.vmem [shape: bf16[2,16,128], index: 0, kind: input, shape index: {}]
  %s1 = inlined_call_operand.hbm [shape: bf16[128,128], index: 1, kind: input, shape index: {}]
  %s2 = inlined_call_operand.vmem [shape: f32[16,128], index: 2, kind: input, shape index: {}]
  %s3 = inlined_call_operand.vmem [shape: f32[2,1,128], index: 3, kind: input, shape index: {}]
  %s4 = inlined_call_operand.vmem [shape: f32[2,1,128], index: 4, kind: input, shape index: {}]
  %s5 = inlined_call_operand.vmem [shape: bf16[2,128,768], index: 5, kind: input, shape index: {}]
  %s6 = inlined_call_operand.vmem [shape: f32[2,1,768], index: 6, kind: input, shape index: {}]
  %s7 = inlined_call_operand.vmem [shape: bf16[2,128,128], index: 7, kind: input, shape index: {}]
  %s8 = inlined_call_operand.vmem [shape: f32[2,1,128], index: 8, kind: input, shape index: {}]
  %s9 = inlined_call_operand.vmem [shape: f32[2,1,128], index: 9, kind: input, shape index: {}]
  %s10 = inlined_call_operand.vmem [shape: f32[2,1,128], index: 10, kind: input, shape index: {}]
  %s11 = inlined_call_operand.vmem [shape: bf16[2,128,128], index: 11, kind: input, shape index: {}]
  %s12 = inlined_call_operand.vmem [shape: f32[2,1,128], index: 12, kind: input, shape index: {}]
  %s13 = inlined_call_operand.hbm [shape: bf16[2,128,128], index: 13, kind: input, shape index: {}]
  %s14 = inlined_call_operand.vmem [shape: f32[2,1,128], index: 14, kind: input, shape index: {}]
  %s15 = inlined_call_operand.vmem [shape: f32[1,128], index: 15, kind: input, shape index: {}]
  %s16 = inlined_call_operand.vmem [shape: f32[1,128], index: 16, kind: input, shape index: {}]
  %s17 = inlined_call_operand.hbm [shape: f32[2,16,128], index: 17, kind: output, shape index: {}]
  %s18 = sld [smem:[#allocation0]]
  $region117: #{siglip_vision_transformer.1} parent=0
    _
  %s20 = ssub.s32 1, %s18
  %s21 = scalar_select 0, %s20, %s18
  $region1: #{siglip_vision_transformer.1} parent=0
    #allocation3 [shape = 'u8[32768]{0}', space=vmem, size = 0x8000, scoped, tag = 'input window, operand 1, single buffered']
    #allocation4 [shape = 's32[2]{0}', space=sflag, size = 0x8, scoped, tag = 'scoped memory for siglip_vision_transformer.1']
    #allocation5 [shape = 's32[2]{0}', space=sflag, size = 0x8, scoped, tag = 'scoped memory for siglip_vision_transformer.1']
    #allocation6 [shape = 'u8[65536]{0}', space=vmem, size = 0x10000, scoped, tag = 'input window, operand 13']
    #allocation7 [shape = 's32[2]{0}', space=sflag, size = 0x8, scoped, tag = 'scoped memory for siglip_vision_transformer.1']
    #allocation8 [shape = 'u8[16384]{0}', space=vmem, size = 0x4000, scoped, tag = 'output window, operand 0']
    %22 = vsyncpa [#allocation4], 0
    %23 = vsyncpa [#allocation7], 0
    %s24 = scalar_lea.sflag [#allocation7], 1
    %25 = vsyncpa %s24, 0
    %26 = vsyncpa [#allocation5], 0
    %s27 = scalar_lea.sflag [#allocation5], 1
    %28 = vsyncpa %s27, 0
    loop: start=0, step=1, limit=6
    $region2: #{siglip_vision_transformer.1} parent=1 // loop_pre_header
      _
    $region3: #{siglip_vision_transformer.1} parent=1 // loop_header
      %s30 = sphi 0, %s34
      %p31 = scmp.ge.s32.totalorder %s30, 6
      %s37 = sphi 0, %s49
      %s38 = sphi 0, %s45
      %s39 = sphi 0, %s37
      %s40 = sphi 0, %s38
      %s41 = sphi 0, %s39
      %s42 = sphi 0, %s40
      %s52 = sphi 0, %s54
      %s55 = sphi 0, %s52
      %s56 = sphi 0, %s55
      %s72 = sphi 0, %s56
      %s76 = sphi 0, %s76
      %s78 = sphi 0, %s76
      %s79 = sphi 0, %s78
      %s93 = sphi 0, %s79
      %s97 = sphi 0, %s97
      %s99 = sphi 0, %s97
      %s100 = sphi 0, %s99
      %s114 = sphi 0, %s100
      %s120 = sphi 0, %s122
      %s123 = sphi 0, %s120
      %s124 = sphi 0, %s123
      %s140 = sphi 0, %s124
      %s146 = sphi 0, %s148
      %s149 = sphi 0, %s146
      %s150 = sphi 0, %s149
      %s166 = sphi 0, %s150
      %s172 = sphi 0, %s174
      %s175 = sphi 0, %s172
      %s176 = sphi 0, %s175
      %s192 = sphi 0, %s176
      %s198 = sphi 0, %s200
      %s201 = sphi 0, %s198
      %s202 = sphi 0, %s201
      %s218 = sphi 0, %s202
      %s224 = sphi 0, %s226
      %s227 = sphi 0, %s224
      %s228 = sphi 0, %s227
      %s244 = sphi 0, %s228
      %s250 = sphi 0, %s252
      %s253 = sphi 0, %s250
      %s254 = sphi 0, %s253
      %s270 = sphi 0, %s254
      %s276 = sphi 0, %s278
      %s279 = sphi 0, %s276
      %s280 = sphi 0, %s279
      %s296 = sphi 0, %s280
      %s302 = sphi 0, %s304
      %s305 = sphi 0, %s302
      %s306 = sphi 0, %s305
      %s322 = sphi 0, %s306
      %s328 = sphi 0, %s330
      %s331 = sphi 0, %s328
      %s332 = sphi 0, %s331
      %s348 = sphi 0, %s332
      %s354 = sphi 0, %s356
      %s357 = sphi 0, %s354
      %s358 = sphi 0, %s357
      %s374 = sphi 0, %s358
      %s380 = sphi 0, %s382
      %s383 = sphi 0, %s380
      %s384 = sphi 0, %s383
      %s400 = sphi 0, %s384
      %s406 = sphi 0, %s408
      %s409 = sphi 0, %s406
      %s410 = sphi 0, %s409
      %s426 = sphi 0, %s410
      %s430 = sphi 0, %s430
      %s432 = sphi 0, %s430
      %s433 = sphi 0, %s432
      %s447 = sphi 0, %s433
      %s451 = sphi 0, %s451
      %s453 = sphi 0, %s451
      %s454 = sphi 0, %s453
      %s468 = sphi 0, %s454
      %s474 = sphi 0, %s476
      %s477 = sphi 0, %s474
      %s478 = sphi 0, %s477
      %s494 = sphi 0, %s478
    $region4: #{siglip_vision_transformer.1} parent=1 // loop_header_branch
      %33 = sbr.rel (%p31) target = $region8
    $region5: #{siglip_vision_transformer.1} parent=1 // loop_body
      %s35 = ssub.s32 %s30, 1
      %s36 = ssub.s32 %s30, 2
      %s43 = sadd.s32 1, %s38
      %p44 = scmp.ge.s32.totalorder %s43, 2
      %s45 = scalar_select %p44, 0, %s43
      %s46 = sadd.s32 1, %s37
      %s47 = scalar_select %p44, %s46, %s37
      %p48 = scmp.ge.s32.totalorder %s47, 2
      %s49 = scalar_select %p48, 0, %s47
      %s50 = ssub.s32 %s37, %s49
      %p51 = scmp.eq.s32.totalorder %s50, 0
      %s53 = sadd.s32 %s52, 1
      %s54 = scalar_select %p51, %s52, %s53
      %p57 = pneg %p51
      %p58 = scmp.eq.s32.totalorder %s30, 3
      %p59 = por %p57, %p58
      %p60 = scmp.ne.s32.totalorder %s52, %s55
      %p61 = scmp.eq.s32.totalorder %s30, 0
      %p62 = por %p60, %p61
      %p63 = scmp.ne.s32.totalorder %s52, %s55
      %p64 = scmp.eq.s32.totalorder %s35, 3
      %p65 = por %p63, %p64
      %p66 = scmp.ne.s32.totalorder %s55, %s56
      %p67 = scmp.eq.s32.totalorder %s35, 0
      %p68 = por %p66, %p67
      %p69 = scmp.ne.s32.totalorder %s55, %s56
      %p70 = scmp.eq.s32.totalorder %s36, 3
      %p71 = por %p69, %p70
      %p73 = scmp.ne.s32.totalorder %s56, %s72
      %p74 = scmp.eq.s32.totalorder %s36, 0
      %p75 = por %p73, %p74
      %s77 = sadd.s32 %s76, 1
      %p80 = scmp.eq.s32.totalorder %s30, 3
      %p81 = scmp.ne.s32.totalorder %s76, %s78
      %p82 = scmp.eq.s32.totalorder %s30, 0
      %p83 = por %p81, %p82
      %p84 = scmp.ne.s32.totalorder %s76, %s78
      %p85 = scmp.eq.s32.totalorder %s35, 3
      %p86 = por %p84, %p85
      %p87 = scmp.ne.s32.totalorder %s78, %s79
      %p88 = scmp.eq.s32.totalorder %s35, 0
      %p89 = por %p87, %p88
      %p90 = scmp.ne.s32.totalorder %s78, %s79
      %p91 = scmp.eq.s32.totalorder %s36, 3
      %p92 = por %p90, %p91
      %p94 = scmp.ne.s32.totalorder %s79, %s93
      %p95 = scmp.eq.s32.totalorder %s36, 0
      %p96 = por %p94, %p95
      %s98 = sadd.s32 %s97, 1
      %p101 = scmp.eq.s32.totalorder %s30, 3
      %p102 = scmp.ne.s32.totalorder %s97, %s99
      %p103 = scmp.eq.s32.totalorder %s30, 0
      %p104 = por %p102, %p103
      %p105 = scmp.ne.s32.totalorder %s97, %s99
      %p106 = scmp.eq.s32.totalorder %s35, 3
      %p107 = por %p105, %p106
      %p108 = scmp.ne.s32.totalorder %s99, %s100
      %p109 = scmp.eq.s32.totalorder %s35, 0
      %p110 = por %p108, %p109
      %p111 = scmp.ne.s32.totalorder %s99, %s100
      %p112 = scmp.eq.s32.totalorder %s36, 3
      %p113 = por %p111, %p112
      %p115 = scmp.ne.s32.totalorder %s100, %s114
      %p116 = scmp.eq.s32.totalorder %s36, 0
      %p117 = por %p115, %p116
      %s118 = ssub.s32 %s38, %s45
      %p119 = scmp.eq.s32.totalorder %s118, 0
      %s121 = sadd.s32 %s120, 1
      %s122 = scalar_select %p119, %s120, %s121
      %p125 = pneg %p119
      %p126 = scmp.eq.s32.totalorder %s30, 3
      %p127 = por %p125, %p126
      %p128 = scmp.ne.s32.totalorder %s120, %s123
      %p129 = scmp.eq.s32.totalorder %s30, 0
      %p130 = por %p128, %p129
      %p131 = scmp.ne.s32.totalorder %s120, %s123
      %p132 = scmp.eq.s32.totalorder %s35, 3
      %p133 = por %p131, %p132
      %p134 = scmp.ne.s32.totalorder %s123, %s124
      %p135 = scmp.eq.s32.totalorder %s35, 0
      %p136 = por %p134, %p135
      %p137 = scmp.ne.s32.totalorder %s123, %s124
      %p138 = scmp.eq.s32.totalorder %s36, 3
      %p139 = por %p137, %p138
      %p141 = scmp.ne.s32.totalorder %s124, %s140
      %p142 = scmp.eq.s32.totalorder %s36, 0
      %p143 = por %p141, %p142
      %s144 = ssub.s32 %s38, %s45
      %p145 = scmp.eq.s32.totalorder %s144, 0
      %s147 = sadd.s32 %s146, 1
      %s148 = scalar_select %p145, %s146, %s147
      %p151 = pneg %p145
      %p152 = scmp.eq.s32.totalorder %s30, 3
      %p153 = por %p151, %p152
      %p154 = scmp.ne.s32.totalorder %s146, %s149
      %p155 = scmp.eq.s32.totalorder %s30, 0
      %p156 = por %p154, %p155
      %p157 = scmp.ne.s32.totalorder %s146, %s149
      %p158 = scmp.eq.s32.totalorder %s35, 3
      %p159 = por %p157, %p158
      %p160 = scmp.ne.s32.totalorder %s149, %s150
      %p161 = scmp.eq.s32.totalorder %s35, 0
      %p162 = por %p160, %p161
      %p163 = scmp.ne.s32.totalorder %s149, %s150
      %p164 = scmp.eq.s32.totalorder %s36, 3
      %p165 = por %p163, %p164
      %p167 = scmp.ne.s32.totalorder %s150, %s166
      %p168 = scmp.eq.s32.totalorder %s36, 0
      %p169 = por %p167, %p168
      %s170 = ssub.s32 %s38, %s45
      %p171 = scmp.eq.s32.totalorder %s170, 0
      %s173 = sadd.s32 %s172, 1
      %s174 = scalar_select %p171, %s172, %s173
      %p177 = pneg %p171
      %p178 = scmp.eq.s32.totalorder %s30, 3
      %p179 = por %p177, %p178
      %p180 = scmp.ne.s32.totalorder %s172, %s175
      %p181 = scmp.eq.s32.totalorder %s30, 0
      %p182 = por %p180, %p181
      %p183 = scmp.ne.s32.totalorder %s172, %s175
      %p184 = scmp.eq.s32.totalorder %s35, 3
      %p185 = por %p183, %p184
      %p186 = scmp.ne.s32.totalorder %s175, %s176
      %p187 = scmp.eq.s32.totalorder %s35, 0
      %p188 = por %p186, %p187
      %p189 = scmp.ne.s32.totalorder %s175, %s176
      %p190 = scmp.eq.s32.totalorder %s36, 3
      %p191 = por %p189, %p190
      %p193 = scmp.ne.s32.totalorder %s176, %s192
      %p194 = scmp.eq.s32.totalorder %s36, 0
      %p195 = por %p193, %p194
      %s196 = ssub.s32 %s38, %s45
      %p197 = scmp.eq.s32.totalorder %s196, 0
      %s199 = sadd.s32 %s198, 1
      %s200 = scalar_select %p197, %s198, %s199
      %p203 = pneg %p197
      %p204 = scmp.eq.s32.totalorder %s30, 3
      %p205 = por %p203, %p204
      %p206 = scmp.ne.s32.totalorder %s198, %s201
      %p207 = scmp.eq.s32.totalorder %s30, 0
      %p208 = por %p206, %p207
      %p209 = scmp.ne.s32.totalorder %s198, %s201
      %p210 = scmp.eq.s32.totalorder %s35, 3
      %p211 = por %p209, %p210
      %p212 = scmp.ne.s32.totalorder %s201, %s202
      %p213 = scmp.eq.s32.totalorder %s35, 0
      %p214 = por %p212, %p213
      %p215 = scmp.ne.s32.totalorder %s201, %s202
      %p216 = scmp.eq.s32.totalorder %s36, 3
      %p217 = por %p215, %p216
      %p219 = scmp.ne.s32.totalorder %s202, %s218
      %p220 = scmp.eq.s32.totalorder %s36, 0
      %p221 = por %p219, %p220
      %s222 = ssub.s32 %s38, %s45
      %p223 = scmp.eq.s32.totalorder %s222, 0
      %s225 = sadd.s32 %s224, 1
      %s226 = scalar_select %p223, %s224, %s225
      %p229 = pneg %p223
      %p230 = scmp.eq.s32.totalorder %s30, 3
      %p231 = por %p229, %p230
      %p232 = scmp.ne.s32.totalorder %s224, %s227
      %p233 = scmp.eq.s32.totalorder %s30, 0
      %p234 = por %p232, %p233
      %p235 = scmp.ne.s32.totalorder %s224, %s227
      %p236 = scmp.eq.s32.totalorder %s35, 3
      %p237 = por %p235, %p236
      %p238 = scmp.ne.s32.totalorder %s227, %s228
      %p239 = scmp.eq.s32.totalorder %s35, 0
      %p240 = por %p238, %p239
      %p241 = scmp.ne.s32.totalorder %s227, %s228
      %p242 = scmp.eq.s32.totalorder %s36, 3
      %p243 = por %p241, %p242
      %p245 = scmp.ne.s32.totalorder %s228, %s244
      %p246 = scmp.eq.s32.totalorder %s36, 0
      %p247 = por %p245, %p246
      %s248 = ssub.s32 %s38, %s45
      %p249 = scmp.eq.s32.totalorder %s248, 0
      %s251 = sadd.s32 %s250, 1
      %s252 = scalar_select %p249, %s250, %s251
      %p255 = pneg %p249
      %p256 = scmp.eq.s32.totalorder %s30, 3
      %p257 = por %p255, %p256
      %p258 = scmp.ne.s32.totalorder %s250, %s253
      %p259 = scmp.eq.s32.totalorder %s30, 0
      %p260 = por %p258, %p259
      %p261 = scmp.ne.s32.totalorder %s250, %s253
      %p262 = scmp.eq.s32.totalorder %s35, 3
      %p263 = por %p261, %p262
      %p264 = scmp.ne.s32.totalorder %s253, %s254
      %p265 = scmp.eq.s32.totalorder %s35, 0
      %p266 = por %p264, %p265
      %p267 = scmp.ne.s32.totalorder %s253, %s254
      %p268 = scmp.eq.s32.totalorder %s36, 3
      %p269 = por %p267, %p268
      %p271 = scmp.ne.s32.totalorder %s254, %s270
      %p272 = scmp.eq.s32.totalorder %s36, 0
      %p273 = por %p271, %p272
      %s274 = ssub.s32 %s38, %s45
      %p275 = scmp.eq.s32.totalorder %s274, 0
      %s277 = sadd.s32 %s276, 1
      %s278 = scalar_select %p275, %s276, %s277
      %p281 = pneg %p275
      %p282 = scmp.eq.s32.totalorder %s30, 3
      %p283 = por %p281, %p282
      %p284 = scmp.ne.s32.totalorder %s276, %s279
      %p285 = scmp.eq.s32.totalorder %s30, 0
      %p286 = por %p284, %p285
      %p287 = scmp.ne.s32.totalorder %s276, %s279
      %p288 = scmp.eq.s32.totalorder %s35, 3
      %p289 = por %p287, %p288
      %p290 = scmp.ne.s32.totalorder %s279, %s280
      %p291 = scmp.eq.s32.totalorder %s35, 0
      %p292 = por %p290, %p291
      %p293 = scmp.ne.s32.totalorder %s279, %s280
      %p294 = scmp.eq.s32.totalorder %s36, 3
      %p295 = por %p293, %p294
      %p297 = scmp.ne.s32.totalorder %s280, %s296
      %p298 = scmp.eq.s32.totalorder %s36, 0
      %p299 = por %p297, %p298
      %s300 = ssub.s32 %s38, %s45
      %p301 = scmp.eq.s32.totalorder %s300, 0
      %s303 = sadd.s32 %s302, 1
      %s304 = scalar_select %p301, %s302, %s303
      %p307 = pneg %p301
      %p308 = scmp.eq.s32.totalorder %s30, 3
      %p309 = por %p307, %p308
      %p310 = scmp.ne.s32.totalorder %s302, %s305
      %p311 = scmp.eq.s32.totalorder %s30, 0
      %p312 = por %p310, %p311
      %p313 = scmp.ne.s32.totalorder %s302, %s305
      %p314 = scmp.eq.s32.totalorder %s35, 3
      %p315 = por %p313, %p314
      %p316 = scmp.ne.s32.totalorder %s305, %s306
      %p317 = scmp.eq.s32.totalorder %s35, 0
      %p318 = por %p316, %p317
      %p319 = scmp.ne.s32.totalorder %s305, %s306
      %p320 = scmp.eq.s32.totalorder %s36, 3
      %p321 = por %p319, %p320
      %p323 = scmp.ne.s32.totalorder %s306, %s322
      %p324 = scmp.eq.s32.totalorder %s36, 0
      %p325 = por %p323, %p324
      %s326 = ssub.s32 %s38, %s45
      %p327 = scmp.eq.s32.totalorder %s326, 0
      %s329 = sadd.s32 %s328, 1
      %s330 = scalar_select %p327, %s328, %s329
      %p333 = pneg %p327
      %p334 = scmp.eq.s32.totalorder %s30, 3
      %p335 = por %p333, %p334
      %p336 = scmp.ne.s32.totalorder %s328, %s331
      %p337 = scmp.eq.s32.totalorder %s30, 0
      %p338 = por %p336, %p337
      %p339 = scmp.ne.s32.totalorder %s328, %s331
      %p340 = scmp.eq.s32.totalorder %s35, 3
      %p341 = por %p339, %p340
      %p342 = scmp.ne.s32.totalorder %s331, %s332
      %p343 = scmp.eq.s32.totalorder %s35, 0
      %p344 = por %p342, %p343
      %p345 = scmp.ne.s32.totalorder %s331, %s332
      %p346 = scmp.eq.s32.totalorder %s36, 3
      %p347 = por %p345, %p346
      %p349 = scmp.ne.s32.totalorder %s332, %s348
      %p350 = scmp.eq.s32.totalorder %s36, 0
      %p351 = por %p349, %p350
      %s352 = ssub.s32 %s38, %s45
      %p353 = scmp.eq.s32.totalorder %s352, 0
      %s355 = sadd.s32 %s354, 1
      %s356 = scalar_select %p353, %s354, %s355
      %p359 = pneg %p353
      %p360 = scmp.eq.s32.totalorder %s30, 3
      %p361 = por %p359, %p360
      %p362 = scmp.ne.s32.totalorder %s354, %s357
      %p363 = scmp.eq.s32.totalorder %s30, 0
      %p364 = por %p362, %p363
      %p365 = scmp.ne.s32.totalorder %s354, %s357
      %p366 = scmp.eq.s32.totalorder %s35, 3
      %p367 = por %p365, %p366
      %p368 = scmp.ne.s32.totalorder %s357, %s358
      %p369 = scmp.eq.s32.totalorder %s35, 0
      %p370 = por %p368, %p369
      %p371 = scmp.ne.s32.totalorder %s357, %s358
      %p372 = scmp.eq.s32.totalorder %s36, 3
      %p373 = por %p371, %p372
      %p375 = scmp.ne.s32.totalorder %s358, %s374
      %p376 = scmp.eq.s32.totalorder %s36, 0
      %p377 = por %p375, %p376
      %s378 = ssub.s32 %s38, %s45
      %p379 = scmp.eq.s32.totalorder %s378, 0
      %s381 = sadd.s32 %s380, 1
      %s382 = scalar_select %p379, %s380, %s381
      %p385 = pneg %p379
      %p386 = scmp.eq.s32.totalorder %s30, 3
      %p387 = por %p385, %p386
      %p388 = scmp.ne.s32.totalorder %s380, %s383
      %p389 = scmp.eq.s32.totalorder %s30, 0
      %p390 = por %p388, %p389
      %p391 = scmp.ne.s32.totalorder %s380, %s383
      %p392 = scmp.eq.s32.totalorder %s35, 3
      %p393 = por %p391, %p392
      %p394 = scmp.ne.s32.totalorder %s383, %s384
      %p395 = scmp.eq.s32.totalorder %s35, 0
      %p396 = por %p394, %p395
      %p397 = scmp.ne.s32.totalorder %s383, %s384
      %p398 = scmp.eq.s32.totalorder %s36, 3
      %p399 = por %p397, %p398
      %p401 = scmp.ne.s32.totalorder %s384, %s400
      %p402 = scmp.eq.s32.totalorder %s36, 0
      %p403 = por %p401, %p402
      %s404 = ssub.s32 %s38, %s45
      %p405 = scmp.eq.s32.totalorder %s404, 0
      %s407 = sadd.s32 %s406, 1
      %s408 = scalar_select %p405, %s406, %s407
      %p411 = pneg %p405
      %p412 = scmp.eq.s32.totalorder %s30, 3
      %p413 = por %p411, %p412
      %p414 = scmp.ne.s32.totalorder %s406, %s409
      %p415 = scmp.eq.s32.totalorder %s30, 0
      %p416 = por %p414, %p415
      %p417 = scmp.ne.s32.totalorder %s406, %s409
      %p418 = scmp.eq.s32.totalorder %s35, 3
      %p419 = por %p417, %p418
      %p420 = scmp.ne.s32.totalorder %s409, %s410
      %p421 = scmp.eq.s32.totalorder %s35, 0
      %p422 = por %p420, %p421
      %p423 = scmp.ne.s32.totalorder %s409, %s410
      %p424 = scmp.eq.s32.totalorder %s36, 3
      %p425 = por %p423, %p424
      %p427 = scmp.ne.s32.totalorder %s410, %s426
      %p428 = scmp.eq.s32.totalorder %s36, 0
      %p429 = por %p427, %p428
      %s431 = sadd.s32 %s430, 1
      %p434 = scmp.eq.s32.totalorder %s30, 3
      %p435 = scmp.ne.s32.totalorder %s430, %s432
      %p436 = scmp.eq.s32.totalorder %s30, 0
      %p437 = por %p435, %p436
      %p438 = scmp.ne.s32.totalorder %s430, %s432
      %p439 = scmp.eq.s32.totalorder %s35, 3
      %p440 = por %p438, %p439
      %p441 = scmp.ne.s32.totalorder %s432, %s433
      %p442 = scmp.eq.s32.totalorder %s35, 0
      %p443 = por %p441, %p442
      %p444 = scmp.ne.s32.totalorder %s432, %s433
      %p445 = scmp.eq.s32.totalorder %s36, 3
      %p446 = por %p444, %p445
      %p448 = scmp.ne.s32.totalorder %s433, %s447
      %p449 = scmp.eq.s32.totalorder %s36, 0
      %p450 = por %p448, %p449
      %s452 = sadd.s32 %s451, 1
      %p455 = scmp.eq.s32.totalorder %s30, 3
      %p456 = scmp.ne.s32.totalorder %s451, %s453
      %p457 = scmp.eq.s32.totalorder %s30, 0
      %p458 = por %p456, %p457
      %p459 = scmp.ne.s32.totalorder %s451, %s453
      %p460 = scmp.eq.s32.totalorder %s35, 3
      %p461 = por %p459, %p460
      %p462 = scmp.ne.s32.totalorder %s453, %s454
      %p463 = scmp.eq.s32.totalorder %s35, 0
      %p464 = por %p462, %p463
      %p465 = scmp.ne.s32.totalorder %s453, %s454
      %p466 = scmp.eq.s32.totalorder %s36, 3
      %p467 = por %p465, %p466
      %p469 = scmp.ne.s32.totalorder %s454, %s468
      %p470 = scmp.eq.s32.totalorder %s36, 0
      %p471 = por %p469, %p470
      %s472 = ssub.s32 %s37, %s49
      %p473 = scmp.eq.s32.totalorder %s472, 0
      %s475 = sadd.s32 %s474, 1
      %s476 = scalar_select %p473, %s474, %s475
      %p479 = pneg %p473
      %p480 = scmp.eq.s32.totalorder %s30, 3
      %p481 = por %p479, %p480
      %p482 = scmp.ne.s32.totalorder %s474, %s477
      %p483 = scmp.eq.s32.totalorder %s30, 0
      %p484 = por %p482, %p483
      %p485 = scmp.ne.s32.totalorder %s474, %s477
      %p486 = scmp.eq.s32.totalorder %s35, 3
      %p487 = por %p485, %p486
      %p488 = scmp.ne.s32.totalorder %s477, %s478
      %p489 = scmp.eq.s32.totalorder %s35, 0
      %p490 = por %p488, %p489
      %p491 = scmp.ne.s32.totalorder %s477, %s478
      %p492 = scmp.eq.s32.totalorder %s36, 3
      %p493 = por %p491, %p492
      %p495 = scmp.ne.s32.totalorder %s478, %s494
      %p496 = scmp.eq.s32.totalorder %s36, 0
      %p497 = por %p495, %p496
      %p498 = scmp.le.s32.totalorder 1, %s30
      %p499 = scmp.lt.s32.totalorder %s30, 5
      %p500 = pnand %p498, %p499
      %p501 = pneg %p500
      // Predicated region
      $region9: #{siglip_vision_transformer.1} parent=5 // pred_check
        _
      $region10: #{siglip_vision_transformer.1} parent=5 // pred_check_branch
        %503 = sbr.rel (%p500) target = $region12
      $region11: #{siglip_vision_transformer.1} parent=5 // pred_region
        %s504 = ssub.s32 %s30, 1
        // Predicated region
        $region13: #{siglip_vision_transformer.1} parent=11 // pred_check
          %p505 = pneg %p89
        $region14: #{siglip_vision_transformer.1} parent=11 // pred_check_branch
          %507 = sbr.rel (%p505) target = $region16
        $region15: #{siglip_vision_transformer.1} parent=11 // pred_region
          %s509 = ssub.s32 1024, 1024
          %510 = vsyncadd [#allocation4], %s509
          %s511 = sshll.u32 [#allocation3], 4
          %s512 = int_to_ptr.vmem [resolvable:$true] %s511
          %517 = dma.hbm_to_vmem [thread:$0]  %s1, 1024, %s512, [#allocation4], 64, 64, 4
        $region16: #{siglip_vision_transformer.1} parent=11 // pred_fallthru
          _
        // Predicated region
        $region17: #{siglip_vision_transformer.1} parent=11 // pred_check
          %p518 = pneg %p110
        $region18: #{siglip_vision_transformer.1} parent=11 // pred_check_branch
          %520 = sbr.rel (%p518) target = $region20
        $region19: #{siglip_vision_transformer.1} parent=11 // pred_region
          _
        $region20: #{siglip_vision_transformer.1} parent=11 // pred_fallthru
          _
        // Predicated region
        $region21: #{siglip_vision_transformer.1} parent=11 // pred_check
          %p521 = pneg %p443
        $region22: #{siglip_vision_transformer.1} parent=11 // pred_check_branch
          %523 = sbr.rel (%p521) target = $region24
        $region23: #{siglip_vision_transformer.1} parent=11 // pred_region
          _
        $region24: #{siglip_vision_transformer.1} parent=11 // pred_fallthru
          _
        // Predicated region
        $region25: #{siglip_vision_transformer.1} parent=11 // pred_check
          %p524 = pneg %p464
        $region26: #{siglip_vision_transformer.1} parent=11 // pred_check_branch
          %526 = sbr.rel (%p524) target = $region28
        $region27: #{siglip_vision_transformer.1} parent=11 // pred_region
          _
        $region28: #{siglip_vision_transformer.1} parent=11 // pred_fallthru
          _
      $region12: #{siglip_vision_transformer.1} parent=5 // pred_fallthru
        _
      %p527 = scmp.lt.s32.totalorder %s30, 4
      // Predicated region
      $region29: #{siglip_vision_transformer.1} parent=5 // pred_check
        %p528 = pneg %p527
      $region30: #{siglip_vision_transformer.1} parent=5 // pred_check_branch
        %530 = sbr.rel (%p528) target = $region32
      $region31: #{siglip_vision_transformer.1} parent=5 // pred_region
        // Predicated region
        $region33: #{siglip_vision_transformer.1} parent=31 // pred_check
          %p531 = pneg %p62
        $region34: #{siglip_vision_transformer.1} parent=31 // pred_check_branch
          %533 = sbr.rel (%p531) target = $region36
        $region35: #{siglip_vision_transformer.1} parent=31 // pred_region
          %p534 = scmp.lt.s32.totalorder %s37, 1
          %s535 = scalar_select %p534, %s37, 1
          %s536 = smul.addr %s535, 2
          %s537 = smul.addr %s536, 4
          %s538 = scalar_lea.vmem %s0, %s537
        $region36: #{siglip_vision_transformer.1} parent=31 // pred_fallthru
          _
        // Predicated region
        $region37: #{siglip_vision_transformer.1} parent=31 // pred_check
          %p539 = pneg %p130
        $region38: #{siglip_vision_transformer.1} parent=31 // pred_check_branch
          %541 = sbr.rel (%p539) target = $region40
        $region39: #{siglip_vision_transformer.1} parent=31 // pred_region
          %p542 = scmp.lt.s32.totalorder %s38, 1
          %s543 = scalar_select %p542, %s38, 1
          %s544 = scalar_lea.vmem %s3, %s543
        $region40: #{siglip_vision_transformer.1} parent=31 // pred_fallthru
          _
        // Predicated region
        $region41: #{siglip_vision_transformer.1} parent=31 // pred_check
          %p545 = pneg %p156
        $region42: #{siglip_vision_transformer.1} parent=31 // pred_check_branch
          %547 = sbr.rel (%p545) target = $region44
        $region43: #{siglip_vision_transformer.1} parent=31 // pred_region
          %p548 = scmp.lt.s32.totalorder %s38, 1
          %s549 = scalar_select %p548, %s38, 1
          %s550 = scalar_lea.vmem %s4, %s549
        $region44: #{siglip_vision_transformer.1} parent=31 // pred_fallthru
          _
        // Predicated region
        $region45: #{siglip_vision_transformer.1} parent=31 // pred_check
          %p551 = pneg %p182
        $region46: #{siglip_vision_transformer.1} parent=31 // pred_check_branch
          %553 = sbr.rel (%p551) target = $region48
        $region47: #{siglip_vision_transformer.1} parent=31 // pred_region
          %p554 = scmp.lt.s32.totalorder %s38, 1
          %s555 = scalar_select %p554, %s38, 1
          %s556 = smul.addr %s555, 96
          %s557 = smul.addr %s556, 4
          %s558 = scalar_lea.vmem %s5, %s557
        $region48: #{siglip_vision_transformer.1} parent=31 // pred_fallthru
          _
        // Predicated region
        $region49: #{siglip_vision_transformer.1} parent=31 // pred_check
          %p559 = pneg %p208
        $region50: #{siglip_vision_transformer.1} parent=31 // pred_check_branch
          %561 = sbr.rel (%p559) target = $region52
        $region51: #{siglip_vision_transformer.1} parent=31 // pred_region
          %p562 = scmp.lt.s32.totalorder %s38, 1
          %s563 = scalar_select %p562, %s38, 1
          %s564 = smul.addr %s563, 6
          %s565 = scalar_lea.vmem %s6, %s564
        $region52: #{siglip_vision_transformer.1} parent=31 // pred_fallthru
          _
        // Predicated region
        $region53: #{siglip_vision_transformer.1} parent=31 // pred_check
          %p566 = pneg %p234
        $region54: #{siglip_vision_transformer.1} parent=31 // pred_check_branch
          %568 = sbr.rel (%p566) target = $region56
        $region55: #{siglip_vision_transformer.1} parent=31 // pred_region
          %p569 = scmp.lt.s32.totalorder %s38, 1
          %s570 = scalar_select %p569, %s38, 1
          %s571 = smul.addr %s570, 16
          %s572 = smul.addr %s571, 4
          %s573 = scalar_lea.vmem %s7, %s572
        $region56: #{siglip_vision_transformer.1} parent=31 // pred_fallthru
          _
        // Predicated region
        $region57: #{siglip_vision_transformer.1} parent=31 // pred_check
          %p574 = pneg %p260
        $region58: #{siglip_vision_transformer.1} parent=31 // pred_check_branch
          %576 = sbr.rel (%p574) target = $region60
        $region59: #{siglip_vision_transformer.1} parent=31 // pred_region
          %p577 = scmp.lt.s32.totalorder %s38, 1
          %s578 = scalar_select %p577, %s38, 1
          %s579 = scalar_lea.vmem %s8, %s578
        $region60: #{siglip_vision_transformer.1} parent=31 // pred_fallthru
          _
        // Predicated region
        $region61: #{siglip_vision_transformer.1} parent=31 // pred_check
          %p580 = pneg %p286
        $region62: #{siglip_vision_transformer.1} parent=31 // pred_check_branch
          %582 = sbr.rel (%p580) target = $region64
        $region63: #{siglip_vision_transformer.1} parent=31 // pred_region
          %p583 = scmp.lt.s32.totalorder %s38, 1
          %s584 = scalar_select %p583, %s38, 1
          %s585 = scalar_lea.vmem %s9, %s584
        $region64: #{siglip_vision_transformer.1} parent=31 // pred_fallthru
          _
        // Predicated region
        $region65: #{siglip_vision_transformer.1} parent=31 // pred_check
          %p586 = pneg %p312
        $region66: #{siglip_vision_transformer.1} parent=31 // pred_check_branch
          %588 = sbr.rel (%p586) target = $region68
        $region67: #{siglip_vision_transformer.1} parent=31 // pred_region
          %p589 = scmp.lt.s32.totalorder %s38, 1
          %s590 = scalar_select %p589, %s38, 1
          %s591 = scalar_lea.vmem %s10, %s590
        $region68: #{siglip_vision_transformer.1} parent=31 // pred_fallthru
          _
        // Predicated region
        $region69: #{siglip_vision_transformer.1} parent=31 // pred_check
          %p592 = pneg %p338
        $region70: #{siglip_vision_transformer.1} parent=31 // pred_check_branch
          %594 = sbr.rel (%p592) target = $region72
        $region71: #{siglip_vision_transformer.1} parent=31 // pred_region
          %p595 = scmp.lt.s32.totalorder %s38, 1
          %s596 = scalar_select %p595, %s38, 1
          %s597 = smul.addr %s596, 16
          %s598 = smul.addr %s597, 4
          %s599 = scalar_lea.vmem %s11, %s598
        $region72: #{siglip_vision_transformer.1} parent=31 // pred_fallthru
          _
        // Predicated region
        $region73: #{siglip_vision_transformer.1} parent=31 // pred_check
          %p600 = pneg %p364
        $region74: #{siglip_vision_transformer.1} parent=31 // pred_check_branch
          %602 = sbr.rel (%p600) target = $region76
        $region75: #{siglip_vision_transformer.1} parent=31 // pred_region
          %p603 = scmp.lt.s32.totalorder %s38, 1
          %s604 = scalar_select %p603, %s38, 1
          %s605 = scalar_lea.vmem %s12, %s604
        $region76: #{siglip_vision_transformer.1} parent=31 // pred_fallthru
          _
        // Predicated region
        $region77: #{siglip_vision_transformer.1} parent=31 // pred_check
          %p606 = pneg %p390
        $region78: #{siglip_vision_transformer.1} parent=31 // pred_check_branch
          %608 = sbr.rel (%p606) target = $region80
        $region79: #{siglip_vision_transformer.1} parent=31 // pred_region
          %s609 = sand.u32 %s380, 1
          %s610 = scalar_lea.sflag [#allocation7], %s609
          %s611 = sand.u32 %s380, 1
          %s612 = smul.addr %s611, 64
          %s613 = scalar_lea.vmem [#allocation6], %s612
          %s615 = ssub.s32 1024, 1024
          %616 = vsyncadd %s610, %s615
          %s617 = smul.addr %s38, 16
          %s618 = smul.addr %s617, 64
          %s619 = scalar_lea.hbm %s13, %s618
          %s620 = sshll.u32 %s613, 4
          %s621 = int_to_ptr.vmem [resolvable:$true] %s620
          %626 = dma.hbm_to_vmem [thread:$0]  %s619, 1024, %s621, %s610, 64, 64, 4
        $region80: #{siglip_vision_transformer.1} parent=31 // pred_fallthru
          _
        // Predicated region
        $region81: #{siglip_vision_transformer.1} parent=31 // pred_check
          %p627 = pneg %p416
        $region82: #{siglip_vision_transformer.1} parent=31 // pred_check_branch
          %629 = sbr.rel (%p627) target = $region84
        $region83: #{siglip_vision_transformer.1} parent=31 // pred_region
          %p630 = scmp.lt.s32.totalorder %s38, 1
          %s631 = scalar_select %p630, %s38, 1
          %s632 = scalar_lea.vmem %s14, %s631
        $region84: #{siglip_vision_transformer.1} parent=31 // pred_fallthru
          _
      $region32: #{siglip_vision_transformer.1} parent=5 // pred_fallthru
        _
      %p633 = scmp.le.s32.totalorder 1, %s30
      %p634 = scmp.lt.s32.totalorder %s30, 5
      %p635 = pnand %p633, %p634
      %p636 = pneg %p635
      // Predicated region
      $region85: #{siglip_vision_transformer.1} parent=5 // pred_check
        _
      $region86: #{siglip_vision_transformer.1} parent=5 // pred_check_branch
        %638 = sbr.rel (%p635) target = $region88
      $region87: #{siglip_vision_transformer.1} parent=5 // pred_region
        %s639 = ssub.s32 %s30, 1
        // Predicated region
        $region89: #{siglip_vision_transformer.1} parent=87 // pred_check
          %p640 = pneg %p89
        $region90: #{siglip_vision_transformer.1} parent=87 // pred_check_branch
          %642 = sbr.rel (%p640) target = $region92
        $region91: #{siglip_vision_transformer.1} parent=87 // pred_region
          %643 = dma.done [#allocation4], 1024
        $region92: #{siglip_vision_transformer.1} parent=87 // pred_fallthru
          _
        %s644 = sand.u32 %s383, 1
        %s645 = scalar_lea.sflag [#allocation7], %s644
        %s646 = sand.u32 %s383, 1
        %s647 = smul.addr %s646, 64
        %s648 = scalar_lea.vmem [#allocation6], %s647
        // Predicated region
        $region93: #{siglip_vision_transformer.1} parent=87 // pred_check
          %p649 = pneg %p396
        $region94: #{siglip_vision_transformer.1} parent=87 // pred_check_branch
          %651 = sbr.rel (%p649) target = $region96
        $region95: #{siglip_vision_transformer.1} parent=87 // pred_region
          %652 = dma.done %s645, 1024
        $region96: #{siglip_vision_transformer.1} parent=87 // pred_fallthru
          _
        %p653 = scmp.lt.s32.totalorder %s39, 1
        %s654 = scalar_select %p653, %s39, 1
        %s655 = smul.addr %s654, 2
        %s656 = smul.addr %s655, 4
        %s657 = scalar_lea.vmem %s0, %s656
        %p658 = pneg %p68
        %p659 = pneg %p65
        %p660 = pneg %p89
        %p661 = pneg %p86
        %p662 = pneg %p110
        %p663 = pneg %p107
        %p664 = scmp.lt.s32.totalorder %s40, 1
        %s665 = scalar_select %p664, %s40, 1
        %s666 = scalar_lea.vmem %s3, %s665
        %p667 = pneg %p136
        %p668 = pneg %p133
        %p669 = scmp.lt.s32.totalorder %s40, 1
        %s670 = scalar_select %p669, %s40, 1
        %s671 = scalar_lea.vmem %s4, %s670
        %p672 = pneg %p162
        %p673 = pneg %p159
        %p674 = scmp.lt.s32.totalorder %s40, 1
        %s675 = scalar_select %p674, %s40, 1
        %s676 = smul.addr %s675, 96
        %s677 = smul.addr %s676, 4
        %s678 = scalar_lea.vmem %s5, %s677
        %p679 = pneg %p188
        %p680 = pneg %p185
        %p681 = scmp.lt.s32.totalorder %s40, 1
        %s682 = scalar_select %p681, %s40, 1
        %s683 = smul.addr %s682, 6
        %s684 = scalar_lea.vmem %s6, %s683
        %p685 = pneg %p214
        %p686 = pneg %p211
        %p687 = scmp.lt.s32.totalorder %s40, 1
        %s688 = scalar_select %p687, %s40, 1
        %s689 = smul.addr %s688, 16
        %s690 = smul.addr %s689, 4
        %s691 = scalar_lea.vmem %s7, %s690
        %p692 = pneg %p240
        %p693 = pneg %p237
        %p694 = scmp.lt.s32.totalorder %s40, 1
        %s695 = scalar_select %p694, %s40, 1
        %s696 = scalar_lea.vmem %s8, %s695
        %p697 = pneg %p266
        %p698 = pneg %p263
        %p699 = scmp.lt.s32.totalorder %s40, 1
        %s700 = scalar_select %p699, %s40, 1
        %s701 = scalar_lea.vmem %s9, %s700
        %p702 = pneg %p292
        %p703 = pneg %p289
        %p704 = scmp.lt.s32.totalorder %s40, 1
        %s705 = scalar_select %p704, %s40, 1
        %s706 = scalar_lea.vmem %s10, %s705
        %p707 = pneg %p318
        %p708 = pneg %p315
        %p709 = scmp.lt.s32.totalorder %s40, 1
        %s710 = scalar_select %p709, %s40, 1
        %s711 = smul.addr %s710, 16
        %s712 = smul.addr %s711, 4
        %s713 = scalar_lea.vmem %s11, %s712
        %p714 = pneg %p344
        %p715 = pneg %p341
        %p716 = scmp.lt.s32.totalorder %s40, 1
        %s717 = scalar_select %p716, %s40, 1
        %s718 = scalar_lea.vmem %s12, %s717
        %p719 = pneg %p370
        %p720 = pneg %p367
        %s721 = sand.u32 %s383, 1
        %s722 = scalar_lea.sflag [#allocation7], %s721
        %s723 = sand.u32 %s383, 1
        %s724 = smul.addr %s723, 64
        %s725 = scalar_lea.vmem [#allocation6], %s724
        %p726 = pneg %p396
        %p727 = pneg %p393
        %p728 = scmp.lt.s32.totalorder %s40, 1
        %s729 = scalar_select %p728, %s40, 1
        %s730 = scalar_lea.vmem %s14, %s729
        %p731 = pneg %p422
        %p732 = pneg %p419
        %p733 = pneg %p443
        %p734 = pneg %p440
        %p735 = pneg %p464
        %p736 = pneg %p461
        %p737 = pneg %p490
        %p738 = pneg %p487
        %s739 = sand.u32 %s477, 1
        %s740 = scalar_lea.sflag [#allocation5], %s739
        %s741 = sand.u32 %s477, 1
        %s742 = smul.addr %s741, 16
        %s743 = scalar_lea.vmem [#allocation8], %s742
        %p744 = scmp.lt.s32.totalorder %s39, 1
        %s745 = scalar_select %p744, %s39, 1
        %s746 = smul.addr %s745, 2
        %s747 = smul.addr %s746, 4
        %s748 = scalar_lea.vmem %s0, %s747
        %p749 = scmp.lt.s32.totalorder %s40, 1
        %s750 = scalar_select %p749, %s40, 1
        %s751 = scalar_lea.vmem %s3, %s750
        %p752 = scmp.lt.s32.totalorder %s40, 1
        %s753 = scalar_select %p752, %s40, 1
        %s754 = scalar_lea.vmem %s4, %s753
        %p755 = scmp.lt.s32.totalorder %s40, 1
        %s756 = scalar_select %p755, %s40, 1
        %s757 = smul.addr %s756, 96
        %s758 = smul.addr %s757, 4
        %s759 = scalar_lea.vmem %s5, %s758
        %p760 = scmp.lt.s32.totalorder %s40, 1
        %s761 = scalar_select %p760, %s40, 1
        %s762 = smul.addr %s761, 6
        %s763 = scalar_lea.vmem %s6, %s762
        %p764 = scmp.lt.s32.totalorder %s40, 1
        %s765 = scalar_select %p764, %s40, 1
        %s766 = smul.addr %s765, 16
        %s767 = smul.addr %s766, 4
        %s768 = scalar_lea.vmem %s7, %s767
        %p769 = scmp.lt.s32.totalorder %s40, 1
        %s770 = scalar_select %p769, %s40, 1
        %s771 = scalar_lea.vmem %s8, %s770
        %p772 = scmp.lt.s32.totalorder %s40, 1
        %s773 = scalar_select %p772, %s40, 1
        %s774 = scalar_lea.vmem %s9, %s773
        %p775 = scmp.lt.s32.totalorder %s40, 1
        %s776 = scalar_select %p775, %s40, 1
        %s777 = scalar_lea.vmem %s10, %s776
        %p778 = scmp.lt.s32.totalorder %s40, 1
        %s779 = scalar_select %p778, %s40, 1
        %s780 = smul.addr %s779, 16
        %s781 = smul.addr %s780, 4
        %s782 = scalar_lea.vmem %s11, %s781
        %p783 = scmp.lt.s32.totalorder %s40, 1
        %s784 = scalar_select %p783, %s40, 1
        %s785 = scalar_lea.vmem %s12, %s784
        %p786 = scmp.lt.s32.totalorder %s40, 1
        %s787 = scalar_select %p786, %s40, 1
        %s788 = scalar_lea.vmem %s14, %s787
        %p790 = scmp.eq.s32.totalorder %s40, 0
        // Predicated region
        $region97: #{siglip_vision_transformer.1} parent=87 // pred_check
          %p791 = pneg %p790
        $region98: #{siglip_vision_transformer.1} parent=87 // pred_check_branch
          %793 = sbr.rel (%p791) target = $region100
        $region99: #{siglip_vision_transformer.1} parent=87 // pred_region
          %v794 = vld [vmem:[%s748] sm:$0xf]
          %v795 = vld [vmem:[%s748 + $0x4] sm:$0xf]
          %v796 = vld [vmem:[#allocation3] sm:$0xf]
          %v797 = vld [vmem:[#allocation3 + $0x4] sm:$0xf]
          %v798 = vld [vmem:[#allocation3 + $0x8] sm:$0xf]
          %v799 = vld [vmem:[#allocation3 + $0xc] sm:$0xf]
          %v800 = vld [vmem:[#allocation3 + $0x10] sm:$0xf]
          %v801 = vld [vmem:[#allocation3 + $0x14] sm:$0xf]
          %v802 = vld [vmem:[#allocation3 + $0x18] sm:$0xf]
          %v803 = vld [vmem:[#allocation3 + $0x1c] sm:$0xf]
          %v804 = vld [vmem:[#allocation3 + $0x20] sm:$0xf]
          %v805 = vld [vmem:[#allocation3 + $0x24] sm:$0xf]
          %v806 = vld [vmem:[#allocation3 + $0x28] sm:$0xf]
          %v807 = vld [vmem:[#allocation3 + $0x2c] sm:$0xf]
          %v808 = vld [vmem:[#allocation3 + $0x30] sm:$0xf]
          %v809 = vld [vmem:[#allocation3 + $0x34] sm:$0xf]
          %v810 = vld [vmem:[#allocation3 + $0x38] sm:$0xf]
          %v811 = vld [vmem:[#allocation3 + $0x3c] sm:$0xf]
          %v812 = vld [vmem:[%s2] sm:$0xff]
          %v813 = vld [vmem:[%s2 + $0x8] sm:$0xff]
          %v816 = vunpack.c.l.b16 %v794
          %v817 = vunpack.c.l.b16 %v795
          %v818 = vpack.c.b16 %v817, %v816
          %v836 = vunpack.c.l.b16 %v796
          %v837 = vunpack.c.l.b16 %v797
          %v838 = vunpack.c.l.b16 %v798
          %v839 = vunpack.c.l.b16 %v799
          %v840 = vunpack.c.l.b16 %v800
          %v841 = vunpack.c.l.b16 %v801
          %v842 = vunpack.c.l.b16 %v802
          %v843 = vunpack.c.l.b16 %v803
          %v844 = vunpack.c.l.b16 %v804
          %v845 = vunpack.c.l.b16 %v805
          %v846 = vunpack.c.l.b16 %v806
          %v847 = vunpack.c.l.b16 %v807
          %v848 = vunpack.c.l.b16 %v808
          %v849 = vunpack.c.l.b16 %v809
          %v850 = vunpack.c.l.b16 %v810
          %v851 = vunpack.c.l.b16 %v811
          %v852 = vpack.c.b16 %v837, %v836
          %v853 = vpack.c.b16 %v839, %v838
          %v854 = vpack.c.b16 %v841, %v840
          %v855 = vpack.c.b16 %v843, %v842
          %v856 = vpack.c.b16 %v845, %v844
          %v857 = vpack.c.b16 %v847, %v846
          %v858 = vpack.c.b16 %v849, %v848
          %v859 = vpack.c.b16 %v851, %v850
          %868 = vmatprep.subr.bf16.mxu0 0
          %869 = vmatpush1.bf16.msra.mxu0 %v852
          %870 = vmatprep.subr.bf16.mxu0 0
          %871 = vmatpush1.bf16.msra.mxu0 %v853
          %872 = vmatprep.subr.bf16.mxu0 0
          %873 = vmatpush1.bf16.msra.mxu0 %v854
          %874 = vmatprep.subr.bf16.mxu0 0
          %875 = vmatpush1.bf16.msra.mxu0 %v855
          %876 = vmatprep.subr.bf16.mxu0 0
          %877 = vmatpush1.bf16.msra.mxu0 %v856
          %878 = vmatprep.subr.bf16.mxu0 0
          %879 = vmatpush1.bf16.msra.mxu0 %v857
          %880 = vmatprep.subr.bf16.mxu0 0
          %881 = vmatpush1.bf16.msra.mxu0 %v858
          %882 = vmatprep.subr.bf16.mxu0 0
          %883 = vmatpush1.bf16.msra.mxu0 %v859
          %884 = vmatprep.subr.bf16.mxu0 0
          %885 = vmatpush1.bf16.msra.mxu0 0
          %886 = vmatprep.subr.bf16.mxu0 0
          %887 = vmatpush1.bf16.msra.mxu0 0
          %888 = vmatprep.subr.bf16.mxu0 0
          %889 = vmatpush1.bf16.msra.mxu0 0
          %890 = vmatprep.subr.bf16.mxu0 0
          %891 = vmatpush1.bf16.msra.mxu0 0
          %892 = vmatprep.subr.bf16.mxu0 0
          %893 = vmatpush1.bf16.msra.mxu0 0
          %894 = vmatprep.subr.bf16.mxu0 0
          %895 = vmatpush1.bf16.msra.mxu0 0
          %896 = vmatprep.subr.bf16.mxu0 0
          %897 = vmatpush1.bf16.msra.mxu0 0
          %898 = vmatprep.subr.bf16.mxu0 0
          %899 = vmatpush1.bf16.msra.mxu0 0
          %900 = vmatprep.mubr.bf16.mxu0 0
          %901 = vmatmul.mubr.bf16.gmra.mrb[0].mxu0 %v818
          %v902 = vpop.f32.mrb[0].mxu0
          %v903 = vadd.f32 %v812, %v902
          %v904 = vpop.f32.mrb[0].mxu0
          %v905 = vpop.f32.mrb[0].mxu0
          %v906 = vadd.f32 %v813, %v905
          %v907 = vpop.f32.mrb[0].mxu0
          %908 = vdwg.mxu0
          %909 = vst [vmem:[#allocation2] sm:$0xff] %v903
          %910 = vst [vmem:[#allocation2 + $0x8] sm:$0xff] %v906
        $region100: #{siglip_vision_transformer.1} parent=87 // pred_fallthru
          _
        %v911 = vld [vmem:[#allocation2] sm:$0xff]
        %v912 = vld [vmem:[#allocation2 + $0x8] sm:$0xff]
        %v913 = vld [vmem:[%s751] sm:$0x1]
        %v914 = vld [vmem:[%s754] sm:$0x1]
        %915 = vadd.xlane.f32.xlu0 %v911
        %v916 = vpop.xlane.xlu0 %915
        %917 = vadd.xlane.f32.xlu0 %v912
        %v918 = vpop.xlane.xlu0 %917
        %v919 = vmul.f32 %v916, 0.03125
        %v920 = vmul.f32 %v918, 0.03125
        %v921 = vmul.f32 %v911, %v911
        %v922 = vmul.f32 %v912, %v912
        %923 = vadd.xlane.f32.xlu0 %v921
        %v924 = vpop.xlane.xlu0 %923
        %925 = vadd.xlane.f32.xlu0 %v922
        %v926 = vpop.xlane.xlu0 %925
        %v927 = vmul.f32 %v924, 0.03125
        %v928 = vmul.f32 %v926, 0.03125
        %v929 = vmul.f32 %v919, %v919
        %v930 = vmul.f32 %v920, %v920
        %v931 = vsub.f32 %v927, %v929
        %v932 = vsub.f32 %v928, %v930
        %v933 = vsub.f32 %v911, %v919
        %v934 = vsub.f32 %v912, %v920
        %v935 = vadd.f32 %v931, 1e-06
        %v936 = vadd.f32 %v932, 1e-06
        %v937 = vrsqrt.pop %v935
        %v938 = vrsqrt.pop %v936
        %v939 = vmul.f32 %v933, %v937
        %v940 = vmul.f32 %v934, %v938
        %v942 = vlaneseq
        %v943 = vshrl.u32 %v942, 7
        %v944 = vsub.s32 0, %v943
        %v945 = vrot.slane %v913, %v944
        %v947 = vmul.f32 %v939, %v945
        %v948 = vmul.f32 %v940, %v945
        %v950 = vlaneseq
        %v951 = vshrl.u32 %v950, 7
        %v952 = vsub.s32 0, %v951
        %v953 = vrot.slane %v914, %v952
        %v955 = vadd.f32 %v947, %v953
        %v956 = vadd.f32 %v948, %v953
        %v957 = vpack.c.bf16 %v956, %v955
        %v958 = vld [vmem:[%s759] sm:$0xff]
        %v959 = vld [vmem:[%s759 + $0x8] sm:$0xff]
        %v960 = vld [vmem:[%s759 + $0x10] sm:$0xff]
        %v961 = vld [vmem:[%s759 + $0x18] sm:$0xff]
        %v962 = vld [vmem:[%s759 + $0x20] sm:$0xff]
        %v963 = vld [vmem:[%s759 + $0x28] sm:$0xff]
        %v964 = vld [vmem:[%s759 + $0x30] sm:$0xff]
        %v965 = vld [vmem:[%s759 + $0x38] sm:$0xff]
        %v966 = vld [vmem:[%s759 + $0x40] sm:$0xff]
        %v967 = vld [vmem:[%s759 + $0x48] sm:$0xff]
        %v968 = vld [vmem:[%s759 + $0x50] sm:$0xff]
        %v969 = vld [vmem:[%s759 + $0x58] sm:$0xff]
        %v970 = vld [vmem:[%s759 + $0x60] sm:$0xff]
        %v971 = vld [vmem:[%s759 + $0x68] sm:$0xff]
        %v972 = vld [vmem:[%s759 + $0x70] sm:$0xff]
        %v973 = vld [vmem:[%s759 + $0x78] sm:$0xff]
        %v974 = vld [vmem:[%s759 + $0x80] sm:$0xff]
        %v975 = vld [vmem:[%s759 + $0x88] sm:$0xff]
        %v976 = vld [vmem:[%s759 + $0x90] sm:$0xff]
        %v977 = vld [vmem:[%s759 + $0x98] sm:$0xff]
        %v978 = vld [vmem:[%s759 + $0xa0] sm:$0xff]
        %v979 = vld [vmem:[%s759 + $0xa8] sm:$0xff]
        %v980 = vld [vmem:[%s759 + $0xb0] sm:$0xff]
        %v981 = vld [vmem:[%s759 + $0xb8] sm:$0xff]
        %v982 = vld [vmem:[%s759 + $0xc0] sm:$0xff]
        %v983 = vld [vmem:[%s759 + $0xc8] sm:$0xff]
        %v984 = vld [vmem:[%s759 + $0xd0] sm:$0xff]
        %v985 = vld [vmem:[%s759 + $0xd8] sm:$0xff]
        %v986 = vld [vmem:[%s759 + $0xe0] sm:$0xff]
        %v987 = vld [vmem:[%s759 + $0xe8] sm:$0xff]
        %v988 = vld [vmem:[%s759 + $0xf0] sm:$0xff]
        %v989 = vld [vmem:[%s759 + $0xf8] sm:$0xff]
        %v990 = vld [vmem:[%s759 + $0x100] sm:$0xff]
        %v991 = vld [vmem:[%s759 + $0x108] sm:$0xff]
        %v992 = vld [vmem:[%s759 + $0x110] sm:$0xff]
        %v993 = vld [vmem:[%s759 + $0x118] sm:$0xff]
        %v994 = vld [vmem:[%s759 + $0x120] sm:$0xff]
        %v995 = vld [vmem:[%s759 + $0x128] sm:$0xff]
        %v996 = vld [vmem:[%s759 + $0x130] sm:$0xff]
        %v997 = vld [vmem:[%s759 + $0x138] sm:$0xff]
        %v998 = vld [vmem:[%s759 + $0x140] sm:$0xff]
        %v999 = vld [vmem:[%s759 + $0x148] sm:$0xff]
        %v1000 = vld [vmem:[%s759 + $0x150] sm:$0xff]
        %v1001 = vld [vmem:[%s759 + $0x158] sm:$0xff]
        %v1002 = vld [vmem:[%s759 + $0x160] sm:$0xff]
        %v1003 = vld [vmem:[%s759 + $0x168] sm:$0xff]
        %v1004 = vld [vmem:[%s759 + $0x170] sm:$0xff]
        %v1005 = vld [vmem:[%s759 + $0x178] sm:$0xff]
        %v1006 = vld [vmem:[%s763] sm:$0x3f]
        %v1008 = vlaneseq
        %v1009 = vshrl.u32 %v1008, 7
        %v1010 = vsub.s32 0, %v1009
        %v1011 = vrot.slane %v1006, %v1010
        %v1012 = vlaneseq
        %v1013 = vshrl.u32 %v1012, 7
        %v1014 = vsub.s32 1, %v1013
        %v1015 = vrot.slane %v1006, %v1014
        %v1016 = vlaneseq
        %v1017 = vshrl.u32 %v1016, 7
        %v1018 = vsub.s32 2, %v1017
        %v1019 = vrot.slane %v1006, %v1018
        %v1020 = vlaneseq
        %v1021 = vshrl.u32 %v1020, 7
        %v1022 = vsub.s32 3, %v1021
        %v1023 = vrot.slane %v1006, %v1022
        %v1024 = vlaneseq
        %v1025 = vshrl.u32 %v1024, 7
        %v1026 = vsub.s32 4, %v1025
        %v1027 = vrot.slane %v1006, %v1026
        %v1028 = vlaneseq
        %v1029 = vshrl.u32 %v1028, 7
        %v1030 = vsub.s32 5, %v1029
        %v1031 = vrot.slane %v1006, %v1030
        %v1086 = vunpack.c.l.b16 %v958
        %v1087 = vunpack.c.h.b16 %v958
        %v1088 = vunpack.c.l.b16 %v959
        %v1089 = vunpack.c.h.b16 %v959
        %v1090 = vunpack.c.l.b16 %v960
        %v1091 = vunpack.c.h.b16 %v960
        %v1092 = vunpack.c.l.b16 %v961
        %v1093 = vunpack.c.h.b16 %v961
        %v1094 = vunpack.c.l.b16 %v962
        %v1095 = vunpack.c.h.b16 %v962
        %v1096 = vunpack.c.l.b16 %v963
        %v1097 = vunpack.c.h.b16 %v963
        %v1098 = vunpack.c.l.b16 %v964
        %v1099 = vunpack.c.h.b16 %v964
        %v1100 = vunpack.c.l.b16 %v965
        %v1101 = vunpack.c.h.b16 %v965
        %v1102 = vunpack.c.l.b16 %v966
        %v1103 = vunpack.c.h.b16 %v966
        %v1104 = vunpack.c.l.b16 %v967
        %v1105 = vunpack.c.h.b16 %v967
        %v1106 = vunpack.c.l.b16 %v968
        %v1107 = vunpack.c.h.b16 %v968
        %v1108 = vunpack.c.l.b16 %v969
        %v1109 = vunpack.c.h.b16 %v969
        %v1110 = vunpack.c.l.b16 %v970
        %v1111 = vunpack.c.h.b16 %v970
        %v1112 = vunpack.c.l.b16 %v971
        %v1113 = vunpack.c.h.b16 %v971
        %v1114 = vunpack.c.l.b16 %v972
        %v1115 = vunpack.c.h.b16 %v972
        %v1116 = vunpack.c.l.b16 %v973
        %v1117 = vunpack.c.h.b16 %v973
        %v1118 = vunpack.c.l.b16 %v974
        %v1119 = vunpack.c.h.b16 %v974
        %v1120 = vunpack.c.l.b16 %v975
        %v1121 = vunpack.c.h.b16 %v975
        %v1122 = vunpack.c.l.b16 %v976
        %v1123 = vunpack.c.h.b16 %v976
        %v1124 = vunpack.c.l.b16 %v977
        %v1125 = vunpack.c.h.b16 %v977
        %v1126 = vunpack.c.l.b16 %v978
        %v1127 = vunpack.c.h.b16 %v978
        %v1128 = vunpack.c.l.b16 %v979
        %v1129 = vunpack.c.h.b16 %v979
        %v1130 = vunpack.c.l.b16 %v980
        %v1131 = vunpack.c.h.b16 %v980
        %v1132 = vunpack.c.l.b16 %v981
        %v1133 = vunpack.c.h.b16 %v981
        %v1134 = vunpack.c.l.b16 %v982
        %v1135 = vunpack.c.h.b16 %v982
        %v1136 = vunpack.c.l.b16 %v983
        %v1137 = vunpack.c.h.b16 %v983
        %v1138 = vunpack.c.l.b16 %v984
        %v1139 = vunpack.c.h.b16 %v984
        %v1140 = vunpack.c.l.b16 %v985
        %v1141 = vunpack.c.h.b16 %v985
        %v1142 = vunpack.c.l.b16 %v986
        %v1143 = vunpack.c.h.b16 %v986
        %v1144 = vunpack.c.l.b16 %v987
        %v1145 = vunpack.c.h.b16 %v987
        %v1146 = vunpack.c.l.b16 %v988
        %v1147 = vunpack.c.h.b16 %v988
        %v1148 = vunpack.c.l.b16 %v989
        %v1149 = vunpack.c.h.b16 %v989
        %v1150 = vunpack.c.l.b16 %v990
        %v1151 = vunpack.c.h.b16 %v990
        %v1152 = vunpack.c.l.b16 %v991
        %v1153 = vunpack.c.h.b16 %v991
        %v1154 = vunpack.c.l.b16 %v992
        %v1155 = vunpack.c.h.b16 %v992
        %v1156 = vunpack.c.l.b16 %v993
        %v1157 = vunpack.c.h.b16 %v993
        %v1158 = vunpack.c.l.b16 %v994
        %v1159 = vunpack.c.h.b16 %v994
        %v1160 = vunpack.c.l.b16 %v995
        %v1161 = vunpack.c.h.b16 %v995
        %v1162 = vunpack.c.l.b16 %v996
        %v1163 = vunpack.c.h.b16 %v996
        %v1164 = vunpack.c.l.b16 %v997
        %v1165 = vunpack.c.h.b16 %v997
        %v1166 = vunpack.c.l.b16 %v998
        %v1167 = vunpack.c.h.b16 %v998
        %v1168 = vunpack.c.l.b16 %v999
        %v1169 = vunpack.c.h.b16 %v999
        %v1170 = vunpack.c.l.b16 %v1000
        %v1171 = vunpack.c.h.b16 %v1000
        %v1172 = vunpack.c.l.b16 %v1001
        %v1173 = vunpack.c.h.b16 %v1001
        %v1174 = vunpack.c.l.b16 %v1002
        %v1175 = vunpack.c.h.b16 %v1002
        %v1176 = vunpack.c.l.b16 %v1003
        %v1177 = vunpack.c.h.b16 %v1003
        %v1178 = vunpack.c.l.b16 %v1004
        %v1179 = vunpack.c.h.b16 %v1004
        %v1180 = vunpack.c.l.b16 %v1005
        %v1181 = vunpack.c.h.b16 %v1005
        %v1182 = vpack.c.b16 %v1092, %v1086
        %v1183 = vpack.c.b16 %v1093, %v1087
        %v1184 = vpack.c.b16 %v1094, %v1088
        %v1185 = vpack.c.b16 %v1095, %v1089
        %v1186 = vpack.c.b16 %v1096, %v1090
        %v1187 = vpack.c.b16 %v1097, %v1091
        %v1188 = vpack.c.b16 %v1104, %v1098
        %v1189 = vpack.c.b16 %v1105, %v1099
        %v1190 = vpack.c.b16 %v1106, %v1100
        %v1191 = vpack.c.b16 %v1107, %v1101
        %v1192 = vpack.c.b16 %v1108, %v1102
        %v1193 = vpack.c.b16 %v1109, %v1103
        %v1194 = vpack.c.b16 %v1116, %v1110
        %v1195 = vpack.c.b16 %v1117, %v1111
        %v1196 = vpack.c.b16 %v1118, %v1112
        %v1197 = vpack.c.b16 %v1119, %v1113
        %v1198 = vpack.c.b16 %v1120, %v1114
        %v1199 = vpack.c.b16 %v1121, %v1115
        %v1200 = vpack.c.b16 %v1128, %v1122
        %v1201 = vpack.c.b16 %v1129, %v1123
        %v1202 = vpack.c.b16 %v1130, %v1124
        %v1203 = vpack.c.b16 %v1131, %v1125
        %v1204 = vpack.c.b16 %v1132, %v1126
        %v1205 = vpack.c.b16 %v1133, %v1127
        %v1206 = vpack.c.b16 %v1140, %v1134
        %v1207 = vpack.c.b16 %v1141, %v1135
        %v1208 = vpack.c.b16 %v1142, %v1136
        %v1209 = vpack.c.b16 %v1143, %v1137
        %v1210 = vpack.c.b16 %v1144, %v1138
        %v1211 = vpack.c.b16 %v1145, %v1139
        %v1212 = vpack.c.b16 %v1152, %v1146
        %v1213 = vpack.c.b16 %v1153, %v1147
        %v1214 = vpack.c.b16 %v1154, %v1148
        %v1215 = vpack.c.b16 %v1155, %v1149
        %v1216 = vpack.c.b16 %v1156, %v1150
        %v1217 = vpack.c.b16 %v1157, %v1151
        %v1218 = vpack.c.b16 %v1164, %v1158
        %v1219 = vpack.c.b16 %v1165, %v1159
        %v1220 = vpack.c.b16 %v1166, %v1160
        %v1221 = vpack.c.b16 %v1167, %v1161
        %v1222 = vpack.c.b16 %v1168, %v1162
        %v1223 = vpack.c.b16 %v1169, %v1163
        %v1224 = vpack.c.b16 %v1176, %v1170
        %v1225 = vpack.c.b16 %v1177, %v1171
        %v1226 = vpack.c.b16 %v1178, %v1172
        %v1227 = vpack.c.b16 %v1179, %v1173
        %v1228 = vpack.c.b16 %v1180, %v1174
        %v1229 = vpack.c.b16 %v1181, %v1175
        %1278 = vmatprep.subr.bf16.mxu0 %v1183
        %1279 = vmatpush1.bf16.msra.mxu0 %v1182
        %1280 = vmatprep.subr.bf16.mxu0 %v1189
        %1281 = vmatpush1.bf16.msra.mxu0 %v1188
        %1282 = vmatprep.subr.bf16.mxu0 %v1195
        %1283 = vmatpush1.bf16.msra.mxu0 %v1194
        %1284 = vmatprep.subr.bf16.mxu0 %v1201
        %1285 = vmatpush1.bf16.msra.mxu0 %v1200
        %1286 = vmatprep.subr.bf16.mxu0 %v1207
        %1287 = vmatpush1.bf16.msra.mxu0 %v1206
        %1288 = vmatprep.subr.bf16.mxu0 %v1213
        %1289 = vmatpush1.bf16.msra.mxu0 %v1212
        %1290 = vmatprep.subr.bf16.mxu0 %v1219
        %1291 = vmatpush1.bf16.msra.mxu0 %v1218
        %1292 = vmatprep.subr.bf16.mxu0 %v1225
        %1293 = vmatpush1.bf16.msra.mxu0 %v1224
        %1294 = vmatprep.subr.bf16.mxu0 0
        %1295 = vmatpush1.bf16.msra.mxu0 0
        %1296 = vmatprep.subr.bf16.mxu0 0
        %1297 = vmatpush1.bf16.msra.mxu0 0
        %1298 = vmatprep.subr.bf16.mxu0 0
        %1299 = vmatpush1.bf16.msra.mxu0 0
        %1300 = vmatprep.subr.bf16.mxu0 0
        %1301 = vmatpush1.bf16.msra.mxu0 0
        %1302 = vmatprep.subr.bf16.mxu0 0
        %1303 = vmatpush1.bf16.msra.mxu0 0
        %1304 = vmatprep.subr.bf16.mxu0 0
        %1305 = vmatpush1.bf16.msra.mxu0 0
        %1306 = vmatprep.subr.bf16.mxu0 0
        %1307 = vmatpush1.bf16.msra.mxu0 0
        %1308 = vmatprep.subr.bf16.mxu0 0
        %1309 = vmatpush1.bf16.msra.mxu0 0
        %1310 = vmatprep.mubr.bf16.mxu0 0
        %1311 = vmatmul.mubr.bf16.gmra.mrb[0].mxu0 %v957
        %v1312 = vpop.f32.mrb[0].mxu0
        %v1313 = vadd.f32 %v1011, %v1312
        %v1314 = vpop.f32.mrb[0].mxu0
        %v1315 = vadd.f32 %v1015, %v1314
        %v1316 = vpop.f32.mrb[0].mxu0
        %v1317 = vadd.f32 %v1011, %v1316
        %v1318 = vpop.f32.mrb[0].mxu0
        %v1319 = vadd.f32 %v1015, %v1318
        %1320 = vdwg.mxu0
        %1321 = vmatprep.subr.bf16.mxu0 %v1185
        %1322 = vmatpush1.bf16.msra.mxu0 %v1184
        %1323 = vmatprep.subr.bf16.mxu0 %v1191
        %1324 = vmatpush1.bf16.msra.mxu0 %v1190
        %1325 = vmatprep.subr.bf16.mxu0 %v1197
        %1326 = vmatpush1.bf16.msra.mxu0 %v1196
        %1327 = vmatprep.subr.bf16.mxu0 %v1203
        %1328 = vmatpush1.bf16.msra.mxu0 %v1202
        %1329 = vmatprep.subr.bf16.mxu0 %v1209
        %1330 = vmatpush1.bf16.msra.mxu0 %v1208
        %1331 = vmatprep.subr.bf16.mxu0 %v1215
        %1332 = vmatpush1.bf16.msra.mxu0 %v1214
        %1333 = vmatprep.subr.bf16.mxu0 %v1221
        %1334 = vmatpush1.bf16.msra.mxu0 %v1220
        %1335 = vmatprep.subr.bf16.mxu0 %v1227
        %1336 = vmatpush1.bf16.msra.mxu0 %v1226
        %1337 = vmatprep.subr.bf16.mxu0 0
        %1338 = vmatpush1.bf16.msra.mxu0 0
        %1339 = vmatprep.subr.bf16.mxu0 0
        %1340 = vmatpush1.bf16.msra.mxu0 0
        %1341 = vmatprep.subr.bf16.mxu0 0
        %1342 = vmatpush1.bf16.msra.mxu0 0
        %1343 = vmatprep.subr.bf16.mxu0 0
        %1344 = vmatpush1.bf16.msra.mxu0 0
        %1345 = vmatprep.subr.bf16.mxu0 0
        %1346 = vmatpush1.bf16.msra.mxu0 0
        %1347 = vmatprep.subr.bf16.mxu0 0
        %1348 = vmatpush1.bf16.msra.mxu0 0
        %1349 = vmatprep.subr.bf16.mxu0 0
        %1350 = vmatpush1.bf16.msra.mxu0 0
        %1351 = vmatprep.subr.bf16.mxu0 0
        %1352 = vmatpush1.bf16.msra.mxu0 0
        %1353 = vmatprep.mubr.bf16.mxu0 0
        %1354 = vmatmul.mubr.bf16.gmra.mrb[0].mxu0 %v957
        %v1355 = vpop.f32.mrb[0].mxu0
        %v1356 = vadd.f32 %v1019, %v1355
        %v1357 = vpop.f32.mrb[0].mxu0
        %v1358 = vadd.f32 %v1023, %v1357
        %v1359 = vpop.f32.mrb[0].mxu0
        %v1360 = vadd.f32 %v1019, %v1359
        %v1361 = vpop.f32.mrb[0].mxu0
        %v1362 = vadd.f32 %v1023, %v1361
        %1363 = vdwg.mxu0
        %1364 = vmatprep.subr.bf16.mxu0 %v1187
        %1365 = vmatpush1.bf16.msra.mxu0 %v1186
        %1366 = vmatprep.subr.bf16.mxu0 %v1193
        %1367 = vmatpush1.bf16.msra.mxu0 %v1192
        %1368 = vmatprep.subr.bf16.mxu0 %v1199
        %1369 = vmatpush1.bf16.msra.mxu0 %v1198
        %1370 = vmatprep.subr.bf16.mxu0 %v1205
        %1371 = vmatpush1.bf16.msra.mxu0 %v1204
        %1372 = vmatprep.subr.bf16.mxu0 %v1211
        %1373 = vmatpush1.bf16.msra.mxu0 %v1210
        %1374 = vmatprep.subr.bf16.mxu0 %v1217
        %1375 = vmatpush1.bf16.msra.mxu0 %v1216
        %1376 = vmatprep.subr.bf16.mxu0 %v1223
        %1377 = vmatpush1.bf16.msra.mxu0 %v1222
        %1378 = vmatprep.subr.bf16.mxu0 %v1229
        %1379 = vmatpush1.bf16.msra.mxu0 %v1228
        %1380 = vmatprep.subr.bf16.mxu0 0
        %1381 = vmatpush1.bf16.msra.mxu0 0
        %1382 = vmatprep.subr.bf16.mxu0 0
        %1383 = vmatpush1.bf16.msra.mxu0 0
        %1384 = vmatprep.subr.bf16.mxu0 0
        %1385 = vmatpush1.bf16.msra.mxu0 0
        %1386 = vmatprep.subr.bf16.mxu0 0
        %1387 = vmatpush1.bf16.msra.mxu0 0
        %1388 = vmatprep.subr.bf16.mxu0 0
        %1389 = vmatpush1.bf16.msra.mxu0 0
        %1390 = vmatprep.subr.bf16.mxu0 0
        %1391 = vmatpush1.bf16.msra.mxu0 0
        %1392 = vmatprep.subr.bf16.mxu0 0
        %1393 = vmatpush1.bf16.msra.mxu0 0
        %1394 = vmatprep.subr.bf16.mxu0 0
        %1395 = vmatpush1.bf16.msra.mxu0 0
        %1396 = vmatprep.mubr.bf16.mxu0 0
        %1397 = vmatmul.mubr.bf16.gmra.mrb[0].mxu0 %v957
        %v1398 = vpop.f32.mrb[0].mxu0
        %v1399 = vadd.f32 %v1027, %v1398
        %v1400 = vpop.f32.mrb[0].mxu0
        %v1401 = vadd.f32 %v1031, %v1400
        %v1402 = vpop.f32.mrb[0].mxu0
        %v1403 = vadd.f32 %v1027, %v1402
        %v1404 = vpop.f32.mrb[0].mxu0
        %v1405 = vadd.f32 %v1031, %v1404
        %1406 = vdwg.mxu0
        %v1407 = vpack.c.bf16 %v1317, %v1313
        %v1408 = vpack.c.bf16 %v1360, %v1356
        %v1409 = vpack.c.bf16 %v1403, %v1399
        %1410 = vmatprep.subr.bf16.mxu0 0
        %1411 = vmatpush1.bf16.xpose.msra.mxu0 %v1408
        %1412 = vmatprep.subr.bf16.mxu0 0
        %1413 = vmatpush1.bf16.xpose.msra.mxu0 0
        %1414 = vmatprep.subr.bf16.mxu0 0
        %1415 = vmatpush1.bf16.xpose.msra.mxu0 0
        %1416 = vmatprep.subr.bf16.mxu0 0
        %1417 = vmatpush1.bf16.xpose.msra.mxu0 0
        %1418 = vmatprep.subr.bf16.mxu0 0
        %1419 = vmatpush1.bf16.xpose.msra.mxu0 0
        %1420 = vmatprep.subr.bf16.mxu0 0
        %1421 = vmatpush1.bf16.xpose.msra.mxu0 0
        %1422 = vmatprep.subr.bf16.mxu0 0
        %1423 = vmatpush1.bf16.xpose.msra.mxu0 0
        %1424 = vmatprep.subr.bf16.mxu0 0
        %1425 = vmatpush1.bf16.xpose.msra.mxu0 0
        %1426 = vmatprep.subr.bf16.mxu0 0
        %1427 = vmatpush1.bf16.xpose.msra.mxu0 0
        %1428 = vmatprep.subr.bf16.mxu0 0
        %1429 = vmatpush1.bf16.xpose.msra.mxu0 0
        %1430 = vmatprep.subr.bf16.mxu0 0
        %1431 = vmatpush1.bf16.xpose.msra.mxu0 0
        %1432 = vmatprep.subr.bf16.mxu0 0
        %1433 = vmatpush1.bf16.xpose.msra.mxu0 0
        %1434 = vmatprep.subr.bf16.mxu0 0
        %1435 = vmatpush1.bf16.xpose.msra.mxu0 0
        %1436 = vmatprep.subr.bf16.mxu0 0
        %1437 = vmatpush1.bf16.xpose.msra.mxu0 0
        %1438 = vmatprep.subr.bf16.mxu0 0
        %1439 = vmatpush1.bf16.xpose.msra.mxu0 0
        %1440 = vmatprep.subr.bf16.mxu0 0
        %1441 = vmatpush1.bf16.xpose.msra.mxu0 0
        %1442 = vmatprep.mubr.bf16.mxu0 0
        %1443 = vmatmul.mubr.bf16.gmra.mrb[0].mxu0 %v1407
        %v1444 = vpop.f32.mrb[0].mxu0
        %v1445 = vadd.f32 0.0, %v1444
        %v1446 = vpop.f32.mrb[0].mxu0
        %v1447 = vpop.f32.mrb[0].mxu0
        %v1448 = vadd.f32 0.0, %v1447
        %v1449 = vpop.f32.mrb[0].mxu0
        %1450 = vdwg.mxu0
        %vm1451 = vcmask 130048
        %v1452 = vsel %vm1451, %v1445, -inf
        %1453 = vmax.xlane.f32.xlu0 %v1452
        %v1454 = vpop.xlane.xlu0 %1453
        %v1455 = vsel %vm1451, %v1448, -inf
        %1456 = vmax.xlane.f32.xlu0 %v1455
        %v1457 = vpop.xlane.xlu0 %1456
        %v1458 = vsub.f32 %v1445, %v1454
        %v1459 = vsub.f32 %v1448, %v1457
        %v1460 = vmul.f32 %v1458, 1.442695
        %v1461 = vpow.pop %v1460
        %v1462 = vmul.f32 %v1459, 1.442695
        %v1463 = vpow.pop %v1462
        %v1464 = vsel %vm1451, %v1461, 0.0
        %1465 = vadd.xlane.f32.xlu0 %v1464
        %v1466 = vpop.xlane.xlu0 %1465
        %v1467 = vsel %vm1451, %v1463, 0.0
        %1468 = vadd.xlane.f32.xlu0 %v1467
        %v1469 = vpop.xlane.xlu0 %1468
        %v1470 = vrcp.pop %v1466
        %v1471 = vrcp.pop %v1469
        %v1472 = vmul.f32 %v1461, %v1470
        %v1473 = vmul.f32 %v1463, %v1471
        %v1474 = vpack.c.bf16 %v1473, %v1472
        %v1475 = vpack.c.bf16 %v1319, %v1315
        %v1476 = vpack.c.bf16 %v1362, %v1358
        %v1477 = vpack.c.bf16 %v1405, %v1401
        %1478 = vmatprep.subr.bf16.mxu0 0
        %1479 = vmatpush1.bf16.xpose.msra.mxu0 %v1476
        %1480 = vmatprep.subr.bf16.mxu0 0
        %1481 = vmatpush1.bf16.xpose.msra.mxu0 0
        %1482 = vmatprep.subr.bf16.mxu0 0
        %1483 = vmatpush1.bf16.xpose.msra.mxu0 0
        %1484 = vmatprep.subr.bf16.mxu0 0
        %1485 = vmatpush1.bf16.xpose.msra.mxu0 0
        %1486 = vmatprep.subr.bf16.mxu0 0
        %1487 = vmatpush1.bf16.xpose.msra.mxu0 0
        %1488 = vmatprep.subr.bf16.mxu0 0
        %1489 = vmatpush1.bf16.xpose.msra.mxu0 0
        %1490 = vmatprep.subr.bf16.mxu0 0
        %1491 = vmatpush1.bf16.xpose.msra.mxu0 0
        %1492 = vmatprep.subr.bf16.mxu0 0
        %1493 = vmatpush1.bf16.xpose.msra.mxu0 0
        %1494 = vmatprep.subr.bf16.mxu0 0
        %1495 = vmatpush1.bf16.xpose.msra.mxu0 0
        %1496 = vmatprep.subr.bf16.mxu0 0
        %1497 = vmatpush1.bf16.xpose.msra.mxu0 0
        %1498 = vmatprep.subr.bf16.mxu0 0
        %1499 = vmatpush1.bf16.xpose.msra.mxu0 0
        %1500 = vmatprep.subr.bf16.mxu0 0
        %1501 = vmatpush1.bf16.xpose.msra.mxu0 0
        %1502 = vmatprep.subr.bf16.mxu0 0
        %1503 = vmatpush1.bf16.xpose.msra.mxu0 0
        %1504 = vmatprep.subr.bf16.mxu0 0
        %1505 = vmatpush1.bf16.xpose.msra.mxu0 0
        %1506 = vmatprep.subr.bf16.mxu0 0
        %1507 = vmatpush1.bf16.xpose.msra.mxu0 0
        %1508 = vmatprep.subr.bf16.mxu0 0
        %1509 = vmatpush1.bf16.xpose.msra.mxu0 0
        %1510 = vmatprep.mubr.bf16.mxu0 0
        %1511 = vmatmul.mubr.bf16.gmra.mrb[0].mxu0 %v1475
        %v1512 = vpop.f32.mrb[0].mxu0
        %v1513 = vadd.f32 0.0, %v1512
        %v1514 = vpop.f32.mrb[0].mxu0
        %v1515 = vpop.f32.mrb[0].mxu0
        %v1516 = vadd.f32 0.0, %v1515
        %v1517 = vpop.f32.mrb[0].mxu0
        %1518 = vdwg.mxu0
        %v1519 = vsel %vm1451, %v1513, -inf
        %1520 = vmax.xlane.f32.xlu0 %v1519
        %v1521 = vpop.xlane.xlu0 %1520
        %v1522 = vsel %vm1451, %v1516, -inf
        %1523 = vmax.xlane.f32.xlu0 %v1522
        %v1524 = vpop.xlane.xlu0 %1523
        %v1525 = vsub.f32 %v1513, %v1521
        %v1526 = vsub.f32 %v1516, %v1524
        %v1527 = vmul.f32 %v1525, 1.442695
        %v1528 = vpow.pop %v1527
        %v1529 = vmul.f32 %v1526, 1.442695
        %v1530 = vpow.pop %v1529
        %v1531 = vsel %vm1451, %v1528, 0.0
        %1532 = vadd.xlane.f32.xlu0 %v1531
        %v1533 = vpop.xlane.xlu0 %1532
        %v1534 = vsel %vm1451, %v1530, 0.0
        %1535 = vadd.xlane.f32.xlu0 %v1534
        %v1536 = vpop.xlane.xlu0 %1535
        %v1537 = vrcp.pop %v1533
        %v1538 = vrcp.pop %v1536
        %v1539 = vmul.f32 %v1528, %v1537
        %v1540 = vmul.f32 %v1530, %v1538
        %v1541 = vpack.c.bf16 %v1540, %v1539
        %v1543 = vsel %vm1451, %v1541, 0
        %1545 = vmatprep.subr.bf16.mxu0 0
        %1546 = vmatpush1.bf16.msra.mxu0 %v1477
        %1547 = vmatprep.subr.bf16.mxu0 0
        %1548 = vmatpush1.bf16.msra.mxu0 0
        %1549 = vmatprep.subr.bf16.mxu0 0
        %1550 = vmatpush1.bf16.msra.mxu0 0
        %1551 = vmatprep.subr.bf16.mxu0 0
        %1552 = vmatpush1.bf16.msra.mxu0 0
        %1553 = vmatprep.subr.bf16.mxu0 0
        %1554 = vmatpush1.bf16.msra.mxu0 0
        %1555 = vmatprep.subr.bf16.mxu0 0
        %1556 = vmatpush1.bf16.msra.mxu0 0
        %1557 = vmatprep.subr.bf16.mxu0 0
        %1558 = vmatpush1.bf16.msra.mxu0 0
        %1559 = vmatprep.subr.bf16.mxu0 0
        %1560 = vmatpush1.bf16.msra.mxu0 0
        %1561 = vmatprep.subr.bf16.mxu0 0
        %1562 = vmatpush1.bf16.msra.mxu0 0
        %1563 = vmatprep.subr.bf16.mxu0 0
        %1564 = vmatpush1.bf16.msra.mxu0 0
        %1565 = vmatprep.subr.bf16.mxu0 0
        %1566 = vmatpush1.bf16.msra.mxu0 0
        %1567 = vmatprep.subr.bf16.mxu0 0
        %1568 = vmatpush1.bf16.msra.mxu0 0
        %1569 = vmatprep.subr.bf16.mxu0 0
        %1570 = vmatpush1.bf16.msra.mxu0 0
        %1571 = vmatprep.subr.bf16.mxu0 0
        %1572 = vmatpush1.bf16.msra.mxu0 0
        %1573 = vmatprep.subr.bf16.mxu0 0
        %1574 = vmatpush1.bf16.msra.mxu0 0
        %1575 = vmatprep.subr.bf16.mxu0 0
        %1576 = vmatpush1.bf16.msra.mxu0 0
        %1577 = vmatprep.mubr.bf16.mxu0 0
        %1578 = vmatmul.mubr.bf16.gmra.mrb[0].mxu0 %v1543
        %v1579 = vpop.f32.mrb[0].mxu0
        %v1580 = vadd.f32 0.0, %v1579
        %v1581 = vpop.f32.mrb[0].mxu0
        %v1582 = vpop.f32.mrb[0].mxu0
        %v1583 = vadd.f32 0.0, %v1582
        %v1584 = vpop.f32.mrb[0].mxu0
        %1585 = vdwg.mxu0
        %v1587 = vsel %vm1451, %v1474, 0
        %1589 = vmatprep.subr.bf16.mxu0 0
        %1590 = vmatpush1.bf16.msra.mxu0 %v1409
        %1591 = vmatprep.subr.bf16.mxu0 0
        %1592 = vmatpush1.bf16.msra.mxu0 0
        %1593 = vmatprep.subr.bf16.mxu0 0
        %1594 = vmatpush1.bf16.msra.mxu0 0
        %1595 = vmatprep.subr.bf16.mxu0 0
        %1596 = vmatpush1.bf16.msra.mxu0 0
        %1597 = vmatprep.subr.bf16.mxu0 0
        %1598 = vmatpush1.bf16.msra.mxu0 0
        %1599 = vmatprep.subr.bf16.mxu0 0
        %1600 = vmatpush1.bf16.msra.mxu0 0
        %1601 = vmatprep.subr.bf16.mxu0 0
        %1602 = vmatpush1.bf16.msra.mxu0 0
        %1603 = vmatprep.subr.bf16.mxu0 0
        %1604 = vmatpush1.bf16.msra.mxu0 0
        %1605 = vmatprep.subr.bf16.mxu0 0
        %1606 = vmatpush1.bf16.msra.mxu0 0
        %1607 = vmatprep.subr.bf16.mxu0 0
        %1608 = vmatpush1.bf16.msra.mxu0 0
        %1609 = vmatprep.subr.bf16.mxu0 0
        %1610 = vmatpush1.bf16.msra.mxu0 0
        %1611 = vmatprep.subr.bf16.mxu0 0
        %1612 = vmatpush1.bf16.msra.mxu0 0
        %1613 = vmatprep.subr.bf16.mxu0 0
        %1614 = vmatpush1.bf16.msra.mxu0 0
        %1615 = vmatprep.subr.bf16.mxu0 0
        %1616 = vmatpush1.bf16.msra.mxu0 0
        %1617 = vmatprep.subr.bf16.mxu0 0
        %1618 = vmatpush1.bf16.msra.mxu0 0
        %1619 = vmatprep.subr.bf16.mxu0 0
        %1620 = vmatpush1.bf16.msra.mxu0 0
        %1621 = vmatprep.mubr.bf16.mxu0 0
        %1622 = vmatmul.mubr.bf16.gmra.mrb[0].mxu0 %v1587
        %v1623 = vpop.f32.mrb[0].mxu0
        %v1624 = vadd.f32 %v1580, %v1623
        %v1625 = vpop.f32.mrb[0].mxu0
        %v1626 = vpop.f32.mrb[0].mxu0
        %v1627 = vadd.f32 %v1583, %v1626
        %v1628 = vpop.f32.mrb[0].mxu0
        %1629 = vdwg.mxu0
        %v1630 = vpack.c.bf16 %v1627, %v1624
        %v1631 = vld [vmem:[%s768] sm:$0xf]
        %v1632 = vld [vmem:[%s768 + $0x4] sm:$0xf]
        %v1633 = vld [vmem:[%s768 + $0x8] sm:$0xf]
        %v1634 = vld [vmem:[%s768 + $0xc] sm:$0xf]
        %v1635 = vld [vmem:[%s768 + $0x10] sm:$0xf]
        %v1636 = vld [vmem:[%s768 + $0x14] sm:$0xf]
        %v1637 = vld [vmem:[%s768 + $0x18] sm:$0xf]
        %v1638 = vld [vmem:[%s768 + $0x1c] sm:$0xf]
        %v1639 = vld [vmem:[%s768 + $0x20] sm:$0xf]
        %v1640 = vld [vmem:[%s768 + $0x24] sm:$0xf]
        %v1641 = vld [vmem:[%s768 + $0x28] sm:$0xf]
        %v1642 = vld [vmem:[%s768 + $0x2c] sm:$0xf]
        %v1643 = vld [vmem:[%s768 + $0x30] sm:$0xf]
        %v1644 = vld [vmem:[%s768 + $0x34] sm:$0xf]
        %v1645 = vld [vmem:[%s768 + $0x38] sm:$0xf]
        %v1646 = vld [vmem:[%s768 + $0x3c] sm:$0xf]
        %v1647 = vld [vmem:[%s771] sm:$0x1]
        %v1649 = vlaneseq
        %v1650 = vshrl.u32 %v1649, 7
        %v1651 = vsub.s32 0, %v1650
        %v1652 = vrot.slane %v1647, %v1651
        %v1670 = vunpack.c.l.b16 %v1631
        %v1671 = vunpack.c.l.b16 %v1632
        %v1672 = vunpack.c.l.b16 %v1633
        %v1673 = vunpack.c.l.b16 %v1634
        %v1674 = vunpack.c.l.b16 %v1635
        %v1675 = vunpack.c.l.b16 %v1636
        %v1676 = vunpack.c.l.b16 %v1637
        %v1677 = vunpack.c.l.b16 %v1638
        %v1678 = vunpack.c.l.b16 %v1639
        %v1679 = vunpack.c.l.b16 %v1640
        %v1680 = vunpack.c.l.b16 %v1641
        %v1681 = vunpack.c.l.b16 %v1642
        %v1682 = vunpack.c.l.b16 %v1643
        %v1683 = vunpack.c.l.b16 %v1644
        %v1684 = vunpack.c.l.b16 %v1645
        %v1685 = vunpack.c.l.b16 %v1646
        %v1686 = vpack.c.b16 %v1671, %v1670
        %v1687 = vpack.c.b16 %v1673, %v1672
        %v1688 = vpack.c.b16 %v1675, %v1674
        %v1689 = vpack.c.b16 %v1677, %v1676
        %v1690 = vpack.c.b16 %v1679, %v1678
        %v1691 = vpack.c.b16 %v1681, %v1680
        %v1692 = vpack.c.b16 %v1683, %v1682
        %v1693 = vpack.c.b16 %v1685, %v1684
        %1702 = vmatprep.subr.bf16.mxu0 0
        %1703 = vmatpush1.bf16.msra.mxu0 %v1686
        %1704 = vmatprep.subr.bf16.mxu0 0
        %1705 = vmatpush1.bf16.msra.mxu0 %v1687
        %1706 = vmatprep.subr.bf16.mxu0 0
        %1707 = vmatpush1.bf16.msra.mxu0 %v1688
        %1708 = vmatprep.subr.bf16.mxu0 0
        %1709 = vmatpush1.bf16.msra.mxu0 %v1689
        %1710 = vmatprep.subr.bf16.mxu0 0
        %1711 = vmatpush1.bf16.msra.mxu0 %v1690
        %1712 = vmatprep.subr.bf16.mxu0 0
        %1713 = vmatpush1.bf16.msra.mxu0 %v1691
        %1714 = vmatprep.subr.bf16.mxu0 0
        %1715 = vmatpush1.bf16.msra.mxu0 %v1692
        %1716 = vmatprep.subr.bf16.mxu0 0
        %1717 = vmatpush1.bf16.msra.mxu0 %v1693
        %1718 = vmatprep.subr.bf16.mxu0 0
        %1719 = vmatpush1.bf16.msra.mxu0 0
        %1720 = vmatprep.subr.bf16.mxu0 0
        %1721 = vmatpush1.bf16.msra.mxu0 0
        %1722 = vmatprep.subr.bf16.mxu0 0
        %1723 = vmatpush1.bf16.msra.mxu0 0
        %1724 = vmatprep.subr.bf16.mxu0 0
        %1725 = vmatpush1.bf16.msra.mxu0 0
        %1726 = vmatprep.subr.bf16.mxu0 0
        %1727 = vmatpush1.bf16.msra.mxu0 0
        %1728 = vmatprep.subr.bf16.mxu0 0
        %1729 = vmatpush1.bf16.msra.mxu0 0
        %1730 = vmatprep.subr.bf16.mxu0 0
        %1731 = vmatpush1.bf16.msra.mxu0 0
        %1732 = vmatprep.subr.bf16.mxu0 0
        %1733 = vmatpush1.bf16.msra.mxu0 0
        %1734 = vmatprep.mubr.bf16.mxu0 0
        %1735 = vmatmul.mubr.bf16.gmra.mrb[0].mxu0 %v1630
        %v1736 = vpop.f32.mrb[0].mxu0
        %v1737 = vadd.f32 %v1652, %v1736
        %v1738 = vpop.f32.mrb[0].mxu0
        %v1739 = vpop.f32.mrb[0].mxu0
        %v1740 = vadd.f32 %v1652, %v1739
        %v1741 = vpop.f32.mrb[0].mxu0
        %1742 = vdwg.mxu0
        %v1743 = vadd.f32 %v911, %v1737
        %v1744 = vadd.f32 %v912, %v1740
        %v1745 = vld [vmem:[%s774] sm:$0x1]
        %v1746 = vld [vmem:[%s777] sm:$0x1]
        %1747 = vadd.xlane.f32.xlu0 %v1743
        %v1748 = vpop.xlane.xlu0 %1747
        %1749 = vadd.xlane.f32.xlu0 %v1744
        %v1750 = vpop.xlane.xlu0 %1749
        %v1751 = vmul.f32 %v1748, 0.03125
        %v1752 = vmul.f32 %v1750, 0.03125
        %v1753 = vmul.f32 %v1743, %v1743
        %v1754 = vmul.f32 %v1744, %v1744
        %1755 = vadd.xlane.f32.xlu0 %v1753
        %v1756 = vpop.xlane.xlu0 %1755
        %1757 = vadd.xlane.f32.xlu0 %v1754
        %v1758 = vpop.xlane.xlu0 %1757
        %v1759 = vmul.f32 %v1756, 0.03125
        %v1760 = vmul.f32 %v1758, 0.03125
        %v1761 = vmul.f32 %v1751, %v1751
        %v1762 = vmul.f32 %v1752, %v1752
        %v1763 = vsub.f32 %v1759, %v1761
        %v1764 = vsub.f32 %v1760, %v1762
        %v1765 = vsub.f32 %v1743, %v1751
        %v1766 = vsub.f32 %v1744, %v1752
        %v1767 = vadd.f32 %v1763, 1e-06
        %v1768 = vadd.f32 %v1764, 1e-06
        %v1769 = vrsqrt.pop %v1767
        %v1770 = vrsqrt.pop %v1768
        %v1771 = vmul.f32 %v1765, %v1769
        %v1772 = vmul.f32 %v1766, %v1770
        %v1774 = vlaneseq
        %v1775 = vshrl.u32 %v1774, 7
        %v1776 = vsub.s32 0, %v1775
        %v1777 = vrot.slane %v1745, %v1776
        %v1779 = vmul.f32 %v1771, %v1777
        %v1780 = vmul.f32 %v1772, %v1777
        %v1782 = vlaneseq
        %v1783 = vshrl.u32 %v1782, 7
        %v1784 = vsub.s32 0, %v1783
        %v1785 = vrot.slane %v1746, %v1784
        %v1787 = vadd.f32 %v1779, %v1785
        %v1788 = vadd.f32 %v1780, %v1785
        %v1789 = vpack.c.bf16 %v1788, %v1787
        %v1790 = vld [vmem:[%s782] sm:$0xf]
        %v1791 = vld [vmem:[%s782 + $0x4] sm:$0xf]
        %v1792 = vld [vmem:[%s782 + $0x8] sm:$0xf]
        %v1793 = vld [vmem:[%s782 + $0xc] sm:$0xf]
        %v1794 = vld [vmem:[%s782 + $0x10] sm:$0xf]
        %v1795 = vld [vmem:[%s782 + $0x14] sm:$0xf]
        %v1796 = vld [vmem:[%s782 + $0x18] sm:$0xf]
        %v1797 = vld [vmem:[%s782 + $0x1c] sm:$0xf]
        %v1798 = vld [vmem:[%s782 + $0x20] sm:$0xf]
        %v1799 = vld [vmem:[%s782 + $0x24] sm:$0xf]
        %v1800 = vld [vmem:[%s782 + $0x28] sm:$0xf]
        %v1801 = vld [vmem:[%s782 + $0x2c] sm:$0xf]
        %v1802 = vld [vmem:[%s782 + $0x30] sm:$0xf]
        %v1803 = vld [vmem:[%s782 + $0x34] sm:$0xf]
        %v1804 = vld [vmem:[%s782 + $0x38] sm:$0xf]
        %v1805 = vld [vmem:[%s782 + $0x3c] sm:$0xf]
        %v1806 = vld [vmem:[%s785] sm:$0x1]
        %v1808 = vlaneseq
        %v1809 = vshrl.u32 %v1808, 7
        %v1810 = vsub.s32 0, %v1809
        %v1811 = vrot.slane %v1806, %v1810
        %v1829 = vunpack.c.l.b16 %v1790
        %v1830 = vunpack.c.l.b16 %v1791
        %v1831 = vunpack.c.l.b16 %v1792
        %v1832 = vunpack.c.l.b16 %v1793
        %v1833 = vunpack.c.l.b16 %v1794
        %v1834 = vunpack.c.l.b16 %v1795
        %v1835 = vunpack.c.l.b16 %v1796
        %v1836 = vunpack.c.l.b16 %v1797
        %v1837 = vunpack.c.l.b16 %v1798
        %v1838 = vunpack.c.l.b16 %v1799
        %v1839 = vunpack.c.l.b16 %v1800
        %v1840 = vunpack.c.l.b16 %v1801
        %v1841 = vunpack.c.l.b16 %v1802
        %v1842 = vunpack.c.l.b16 %v1803
        %v1843 = vunpack.c.l.b16 %v1804
        %v1844 = vunpack.c.l.b16 %v1805
        %v1845 = vpack.c.b16 %v1830, %v1829
        %v1846 = vpack.c.b16 %v1832, %v1831
        %v1847 = vpack.c.b16 %v1834, %v1833
        %v1848 = vpack.c.b16 %v1836, %v1835
        %v1849 = vpack.c.b16 %v1838, %v1837
        %v1850 = vpack.c.b16 %v1840, %v1839
        %v1851 = vpack.c.b16 %v1842, %v1841
        %v1852 = vpack.c.b16 %v1844, %v1843
        %1861 = vmatprep.subr.bf16.mxu0 0
        %1862 = vmatpush1.bf16.msra.mxu0 %v1845
        %1863 = vmatprep.subr.bf16.mxu0 0
        %1864 = vmatpush1.bf16.msra.mxu0 %v1846
        %1865 = vmatprep.subr.bf16.mxu0 0
        %1866 = vmatpush1.bf16.msra.mxu0 %v1847
        %1867 = vmatprep.subr.bf16.mxu0 0
        %1868 = vmatpush1.bf16.msra.mxu0 %v1848
        %1869 = vmatprep.subr.bf16.mxu0 0
        %1870 = vmatpush1.bf16.msra.mxu0 %v1849
        %1871 = vmatprep.subr.bf16.mxu0 0
        %1872 = vmatpush1.bf16.msra.mxu0 %v1850
        %1873 = vmatprep.subr.bf16.mxu0 0
        %1874 = vmatpush1.bf16.msra.mxu0 %v1851
        %1875 = vmatprep.subr.bf16.mxu0 0
        %1876 = vmatpush1.bf16.msra.mxu0 %v1852
        %1877 = vmatprep.subr.bf16.mxu0 0
        %1878 = vmatpush1.bf16.msra.mxu0 0
        %1879 = vmatprep.subr.bf16.mxu0 0
        %1880 = vmatpush1.bf16.msra.mxu0 0
        %1881 = vmatprep.subr.bf16.mxu0 0
        %1882 = vmatpush1.bf16.msra.mxu0 0
        %1883 = vmatprep.subr.bf16.mxu0 0
        %1884 = vmatpush1.bf16.msra.mxu0 0
        %1885 = vmatprep.subr.bf16.mxu0 0
        %1886 = vmatpush1.bf16.msra.mxu0 0
        %1887 = vmatprep.subr.bf16.mxu0 0
        %1888 = vmatpush1.bf16.msra.mxu0 0
        %1889 = vmatprep.subr.bf16.mxu0 0
        %1890 = vmatpush1.bf16.msra.mxu0 0
        %1891 = vmatprep.subr.bf16.mxu0 0
        %1892 = vmatpush1.bf16.msra.mxu0 0
        %1893 = vmatprep.mubr.bf16.mxu0 0
        %1894 = vmatmul.mubr.bf16.gmra.mrb[0].mxu0 %v1789
        %v1895 = vpop.f32.mrb[0].mxu0
        %v1896 = vadd.f32 %v1811, %v1895
        %v1897 = vpop.f32.mrb[0].mxu0
        %v1898 = vpop.f32.mrb[0].mxu0
        %v1899 = vadd.f32 %v1811, %v1898
        %v1900 = vpop.f32.mrb[0].mxu0
        %1901 = vdwg.mxu0
        %v1902 = vmul.f32 %v1896, %v1896
        %v1903 = vmul.f32 %v1899, %v1899
        %v1904 = vmul.f32 %v1896, %v1902
        %v1905 = vmul.f32 %v1899, %v1903
        %v1906 = vmul.f32 %v1904, 0.044715
        %v1907 = vmul.f32 %v1905, 0.044715
        %v1908 = vadd.f32 %v1896, %v1906
        %v1909 = vadd.f32 %v1899, %v1907
        %v1910 = vmul.f32 %v1908, 0.7978846
        %v1911 = vmul.f32 %v1909, 0.7978846
        %v1912 = vtanh.pop %v1910
        %v1913 = vtanh.pop %v1911
        %v1914 = vadd.f32 %v1912, 1.0
        %v1915 = vadd.f32 %v1913, 1.0
        %v1916 = vmul.f32 %v1914, 0.5
        %v1917 = vmul.f32 %v1915, 0.5
        %v1918 = vmul.f32 %v1896, %v1916
        %v1919 = vmul.f32 %v1899, %v1917
        %v1920 = vpack.c.bf16 %v1919, %v1918
        %v1921 = vld [vmem:[%s648] sm:$0xf]
        %v1922 = vld [vmem:[%s648 + $0x4] sm:$0xf]
        %v1923 = vld [vmem:[%s648 + $0x8] sm:$0xf]
        %v1924 = vld [vmem:[%s648 + $0xc] sm:$0xf]
        %v1925 = vld [vmem:[%s648 + $0x10] sm:$0xf]
        %v1926 = vld [vmem:[%s648 + $0x14] sm:$0xf]
        %v1927 = vld [vmem:[%s648 + $0x18] sm:$0xf]
        %v1928 = vld [vmem:[%s648 + $0x1c] sm:$0xf]
        %v1929 = vld [vmem:[%s648 + $0x20] sm:$0xf]
        %v1930 = vld [vmem:[%s648 + $0x24] sm:$0xf]
        %v1931 = vld [vmem:[%s648 + $0x28] sm:$0xf]
        %v1932 = vld [vmem:[%s648 + $0x2c] sm:$0xf]
        %v1933 = vld [vmem:[%s648 + $0x30] sm:$0xf]
        %v1934 = vld [vmem:[%s648 + $0x34] sm:$0xf]
        %v1935 = vld [vmem:[%s648 + $0x38] sm:$0xf]
        %v1936 = vld [vmem:[%s648 + $0x3c] sm:$0xf]
        %v1937 = vld [vmem:[%s788] sm:$0x1]
        %v1939 = vlaneseq
        %v1940 = vshrl.u32 %v1939, 7
        %v1941 = vsub.s32 0, %v1940
        %v1942 = vrot.slane %v1937, %v1941
        %v1960 = vunpack.c.l.b16 %v1921
        %v1961 = vunpack.c.l.b16 %v1922
        %v1962 = vunpack.c.l.b16 %v1923
        %v1963 = vunpack.c.l.b16 %v1924
        %v1964 = vunpack.c.l.b16 %v1925
        %v1965 = vunpack.c.l.b16 %v1926
        %v1966 = vunpack.c.l.b16 %v1927
        %v1967 = vunpack.c.l.b16 %v1928
        %v1968 = vunpack.c.l.b16 %v1929
        %v1969 = vunpack.c.l.b16 %v1930
        %v1970 = vunpack.c.l.b16 %v1931
        %v1971 = vunpack.c.l.b16 %v1932
        %v1972 = vunpack.c.l.b16 %v1933
        %v1973 = vunpack.c.l.b16 %v1934
        %v1974 = vunpack.c.l.b16 %v1935
        %v1975 = vunpack.c.l.b16 %v1936
        %v1976 = vpack.c.b16 %v1961, %v1960
        %v1977 = vpack.c.b16 %v1963, %v1962
        %v1978 = vpack.c.b16 %v1965, %v1964
        %v1979 = vpack.c.b16 %v1967, %v1966
        %v1980 = vpack.c.b16 %v1969, %v1968
        %v1981 = vpack.c.b16 %v1971, %v1970
        %v1982 = vpack.c.b16 %v1973, %v1972
        %v1983 = vpack.c.b16 %v1975, %v1974
        %1992 = vmatprep.subr.bf16.mxu0 0
        %1993 = vmatpush1.bf16.msra.mxu0 %v1976
        %1994 = vmatprep.subr.bf16.mxu0 0
        %1995 = vmatpush1.bf16.msra.mxu0 %v1977
        %1996 = vmatprep.subr.bf16.mxu0 0
        %1997 = vmatpush1.bf16.msra.mxu0 %v1978
        %1998 = vmatprep.subr.bf16.mxu0 0
        %1999 = vmatpush1.bf16.msra.mxu0 %v1979
        %2000 = vmatprep.subr.bf16.mxu0 0
        %2001 = vmatpush1.bf16.msra.mxu0 %v1980
        %2002 = vmatprep.subr.bf16.mxu0 0
        %2003 = vmatpush1.bf16.msra.mxu0 %v1981
        %2004 = vmatprep.subr.bf16.mxu0 0
        %2005 = vmatpush1.bf16.msra.mxu0 %v1982
        %2006 = vmatprep.subr.bf16.mxu0 0
        %2007 = vmatpush1.bf16.msra.mxu0 %v1983
        %2008 = vmatprep.subr.bf16.mxu0 0
        %2009 = vmatpush1.bf16.msra.mxu0 0
        %2010 = vmatprep.subr.bf16.mxu0 0
        %2011 = vmatpush1.bf16.msra.mxu0 0
        %2012 = vmatprep.subr.bf16.mxu0 0
        %2013 = vmatpush1.bf16.msra.mxu0 0
        %2014 = vmatprep.subr.bf16.mxu0 0
        %2015 = vmatpush1.bf16.msra.mxu0 0
        %2016 = vmatprep.subr.bf16.mxu0 0
        %2017 = vmatpush1.bf16.msra.mxu0 0
        %2018 = vmatprep.subr.bf16.mxu0 0
        %2019 = vmatpush1.bf16.msra.mxu0 0
        %2020 = vmatprep.subr.bf16.mxu0 0
        %2021 = vmatpush1.bf16.msra.mxu0 0
        %2022 = vmatprep.subr.bf16.mxu0 0
        %2023 = vmatpush1.bf16.msra.mxu0 0
        %2024 = vmatprep.mubr.bf16.mxu0 0
        %2025 = vmatmul.mubr.bf16.gmra.mrb[0].mxu0 %v1920
        %v2026 = vpop.f32.mrb[0].mxu0
        %v2027 = vadd.f32 %v1942, %v2026
        %v2028 = vpop.f32.mrb[0].mxu0
        %v2029 = vpop.f32.mrb[0].mxu0
        %v2030 = vadd.f32 %v1942, %v2029
        %v2031 = vpop.f32.mrb[0].mxu0
        %2032 = vdwg.mxu0
        %v2033 = vadd.f32 %v1743, %v2027
        %v2034 = vadd.f32 %v1744, %v2030
        %2035 = vst [vmem:[#allocation2] sm:$0xff] %v2033
        %2036 = vst [vmem:[#allocation2 + $0x8] sm:$0xff] %v2034
        %p2037 = scmp.eq.s32.totalorder %s40, 1
        // Predicated region
        $region101: #{siglip_vision_transformer.1} parent=87 // pred_check
          %p2038 = pneg %p2037
        $region102: #{siglip_vision_transformer.1} parent=87 // pred_check_branch
          %2040 = sbr.rel (%p2038) target = $region104
        $region103: #{siglip_vision_transformer.1} parent=87 // pred_region
          %v2041 = vld [vmem:[%s15] sm:$0x1]
          %v2042 = vld [vmem:[%s16] sm:$0x1]
          %2043 = vadd.xlane.f32.xlu0 %v2033
          %v2044 = vpop.xlane.xlu0 %2043
          %2045 = vadd.xlane.f32.xlu0 %v2034
          %v2046 = vpop.xlane.xlu0 %2045
          %v2047 = vmul.f32 %v2044, 0.03125
          %v2048 = vmul.f32 %v2046, 0.03125
          %v2049 = vmul.f32 %v2033, %v2033
          %v2050 = vmul.f32 %v2034, %v2034
          %2051 = vadd.xlane.f32.xlu0 %v2049
          %v2052 = vpop.xlane.xlu0 %2051
          %2053 = vadd.xlane.f32.xlu0 %v2050
          %v2054 = vpop.xlane.xlu0 %2053
          %v2055 = vmul.f32 %v2052, 0.03125
          %v2056 = vmul.f32 %v2054, 0.03125
          %v2057 = vmul.f32 %v2047, %v2047
          %v2058 = vmul.f32 %v2048, %v2048
          %v2059 = vsub.f32 %v2055, %v2057
          %v2060 = vsub.f32 %v2056, %v2058
          %v2061 = vsub.f32 %v2033, %v2047
          %v2062 = vsub.f32 %v2034, %v2048
          %v2063 = vadd.f32 %v2059, 1e-06
          %v2064 = vadd.f32 %v2060, 1e-06
          %v2065 = vrsqrt.pop %v2063
          %v2066 = vrsqrt.pop %v2064
          %v2067 = vmul.f32 %v2061, %v2065
          %v2068 = vmul.f32 %v2062, %v2066
          %v2070 = vlaneseq
          %v2071 = vshrl.u32 %v2070, 7
          %v2072 = vsub.s32 0, %v2071
          %v2073 = vrot.slane %v2041, %v2072
          %v2075 = vmul.f32 %v2067, %v2073
          %v2076 = vmul.f32 %v2068, %v2073
          %v2078 = vlaneseq
          %v2079 = vshrl.u32 %v2078, 7
          %v2080 = vsub.s32 0, %v2079
          %v2081 = vrot.slane %v2042, %v2080
          %v2083 = vadd.f32 %v2075, %v2081
          %v2084 = vadd.f32 %v2076, %v2081
          %2085 = vst [vmem:[%s743] sm:$0xff] %v2083
          %2086 = vst [vmem:[%s743 + $0x8] sm:$0xff] %v2084
        $region104: #{siglip_vision_transformer.1} parent=87 // pred_fallthru
          _
        %s2087 = sand.u32 %s477, 1
        %s2088 = scalar_lea.sflag [#allocation5], %s2087
        %s2089 = sand.u32 %s477, 1
        %s2090 = smul.addr %s2089, 16
        %s2091 = scalar_lea.vmem [#allocation8], %s2090
        // Predicated region
        $region105: #{siglip_vision_transformer.1} parent=87 // pred_check
          %p2092 = pneg %p487
        $region106: #{siglip_vision_transformer.1} parent=87 // pred_check_branch
          %2094 = sbr.rel (%p2092) target = $region108
        $region107: #{siglip_vision_transformer.1} parent=87 // pred_region
          %s2096 = ssub.s32 256, 256
          %2097 = vsyncadd %s2088, %s2096
          %s2098 = smul.addr %s39, 2
          %s2099 = smul.addr %s2098, 128
          %s2100 = scalar_lea.hbm %s17, %s2099
          %s2101 = sshll.u32 %s2091, 4
          %s2102 = int_to_ptr.vmem [resolvable:$true] %s2101
          %2107 = dma.vmem_to_hbm [thread:$0]  %s2102, 256, %s2100, %s2088, 128, 128, 8
        $region108: #{siglip_vision_transformer.1} parent=87 // pred_fallthru
          _
      $region88: #{siglip_vision_transformer.1} parent=5 // pred_fallthru
        _
      %p2108 = scmp.le.s32.totalorder 2, %s30
      // Predicated region
      $region109: #{siglip_vision_transformer.1} parent=5 // pred_check
        %p2109 = pneg %p2108
      $region110: #{siglip_vision_transformer.1} parent=5 // pred_check_branch
        %2111 = sbr.rel (%p2109) target = $region112
      $region111: #{siglip_vision_transformer.1} parent=5 // pred_region
        %s2112 = ssub.s32 %s30, 2
        // Predicated region
        $region113: #{siglip_vision_transformer.1} parent=111 // pred_check
          %p2113 = pneg %p493
        $region114: #{siglip_vision_transformer.1} parent=111 // pred_check_branch
          %2115 = sbr.rel (%p2113) target = $region116
        $region115: #{siglip_vision_transformer.1} parent=111 // pred_region
          %s2116 = sand.u32 %s478, 1
          %s2117 = scalar_lea.sflag [#allocation5], %s2116
          %s2118 = sand.u32 %s478, 1
          %s2119 = smul.addr %s2118, 16
          %s2120 = scalar_lea.vmem [#allocation8], %s2119
          %2121 = dma.done %s2117, 256
        $region116: #{siglip_vision_transformer.1} parent=111 // pred_fallthru
          _
      $region112: #{siglip_vision_transformer.1} parent=5 // pred_fallthru
        _
    $region6: #{siglip_vision_transformer.1} parent=1 // loop_footer
      %s34 = sadd.s32 1, %s30
    $region7: #{siglip_vision_transformer.1} parent=1 // loop_footer_branch
      %29 = sbr.rel target = $region3
    $region8: #{siglip_vision_transformer.1} parent=1 // loop_exit
      _
    %2122 = vsyncpa [#allocation4], 1
    %s2123 = scalar_lea.sflag [#allocation4], 1
    %2124 = vsyncpa %s2123, 1
    %2125 = vsyncpa [#allocation7], 1
    %s2126 = scalar_lea.sflag [#allocation7], 1
    %2127 = vsyncpa %s2126, 1
    %2128 = vsyncpa [#allocation5], 1
    %s2129 = scalar_lea.sflag [#allocation5], 1
    %2130 = vsyncpa %s2129, 1

</llo_original>
